<compile_context>
chip_gen: v6e
topology: v6e:2x2x1
jax: 0.10.0
libtpu: 0.0.40
codegen_flags: <defaults>
</compile_context>

<pallas_src>
import math
import functools

import jax
import jax.numpy as jnp
from jax import lax
from jax.experimental import pallas as pl
from jax.experimental.pallas import tpu as pltpu

# ----------------------------- config (small, consistent with the module) ---
PAD = 0            # onmt.Constants.PAD
SEQ_LEN = 8        # len
BATCH = 2          # batch
VOCAB = 64         # dicts.size()
FEAT_VOCAB = 32    # feature_dict.size()
WORD_VEC = 32      # opt.word_vec_size
FEAT_VEC = 16      # opt.feature_vec_size


def make_positional_encodings(dim, max_len):
    """Exact port of Embeddings.make_positional_encodings (sin even / cos odd)."""
    j = jnp.arange(max_len, dtype=jnp.float32)[:, None]          # (max_len, 1)
    i = jnp.arange(dim, dtype=jnp.float32)[None, :]              # (1, dim)
    k = j / jnp.power(10000.0, 2.0 * i / float(dim))             # (max_len, dim)
    pe = jnp.where((jnp.arange(dim) % 2 == 1)[None, :], jnp.cos(k), jnp.sin(k))
    return pe.astype(jnp.float32)                                # (max_len, dim)


# ----------------------------------- kernel ---------------------------------
def embeddings_kernel(ids_ref, lut_ref, pe_ref, o_ref):
    """One grid step = one block of l_block sequence positions (the lane axis).

    ids_ref : (2B, l_block) int32  rows [0,B)  = word ids per batch element,
                                   rows [B,2B) = feature ids + V (pre-offset)
    lut_ref : (D, V+FV)     f32    fused (BottleLinear-folded) table, transposed
    pe_ref  : (D, l_block)  f32    positional encodings for these positions
    o_ref   : (B*D, l_block) f32   output, batch folded into sublanes
    """
    n_batch = ids_ref.shape[0] // 2
    k = lut_ref.shape[1]                         # V + FV
    lb = ids_ref.shape[1]

    ids = ids_ref[...]                           # (2B, lb)  tiny lane-major DMA
    lut = lut_ref[...]                           # (D, K)    grid-invariant
    pe = pe_ref[...]                             # (D, lb)

    row_iota = lax.broadcasted_iota(jnp.int32, (k, lb), 0)

    cols = []
    for b in range(n_batch):                     # static unroll; B is small
        # "two-hot" select: row wid OR row (V + fid)  ->  one MXU pass does
        # word lookup + feature lookup + their sum.
        hot = ((row_iota == ids[b:b + 1, :]) |
               (row_iota == ids[n_batch + b:n_batch + b + 1, :])
               ).astype(jnp.float32)             # (K, lb)
        h = jnp.dot(lut, hot,
                    preferred_element_type=jnp.float32,
                    precision=lax.Precision.HIGHEST)   # exact f32 select
        cols.append(jnp.maximum(h, 0.0) + pe)    # ReLU + positional enc. (VPU)
    o_ref[...] = jnp.concatenate(cols, axis=0) if n_batch > 1 else cols[0]
    # TODO(synk): dropout omitted (eval-mode / deterministic inference).


# --------------------------------- wrapper -----------------------------------
def fuse_embedding_params(word_lut, feat_lut, w_word, w_feat, bias):
    """Fold BottleLinear into ONE stacked, transposed table (exact rewrite).

    stacked = [word_lut @ W_word + b ; feat_lut @ W_feat]   (V+FV, D)
    returned transposed as (D, V+FV) for the lane-major kernel layout.
    """
    fused_word = word_lut @ w_word + bias          # (V , D)
    fused_feat = feat_lut @ w_feat                 # (FV, D)
    return jnp.concatenate([fused_word, fused_feat], axis=0).T   # (D, V+FV)


@functools.partial(jax.jit, static_argnames=("vocab_size",))
def embeddings_forward(src_input, lut_t, pe_t, *, vocab_size):
    """src_input: (len, batch, 2) int32 -> emb: (len, batch, D) f32."""
    L, B, _ = src_input.shape
    D, K = lut_t.shape

    # Sequence tiling (lane axis of every block).  >=2 parallel blocks for
    # large L so v7x megacore can shard them; single block for small L
    # (v5e/v6e: extra grid steps are pure ~0.35us/step overhead).
    l_block = 256 if L >= 512 else L
    L_pad = ((L + l_block - 1) // l_block) * l_block   # ragged L: pad + slice

    # ids as (2B, L) int32, long axis last (lane-dense, tiny DMA).
    wid = src_input[:, :, 0].astype(jnp.int32).T                      # (B, L)
    fid = (src_input[:, :, 1].astype(jnp.int32) + vocab_size).T       # (B, L)
    ids_t = jnp.concatenate([wid, fid], axis=0)                       # (2B, L)
    pe_l = pe_t[:, :L]                                                # (D, L)
    if L_pad != L:
        ids_t = jnp.pad(ids_t, ((0, 0), (0, L_pad - L)))   # pad ids with 0 (valid row)
        pe_l = jnp.pad(pe_l, ((0, 0), (0, L_pad - L)))

    out_t = pl.pallas_call(
        embeddings_kernel,
        out_shape=jax.ShapeDtypeStruct((B * D, L_pad), jnp.float32),
        grid_spec=pltpu.PrefetchScalarGridSpec(
            num_scalar_prefetch=0,
            grid=(L_pad // l_block,),
            in_specs=[
                pl.BlockSpec((2 * B, l_block), lambda i: (0, i)),   # ids (lane-major)
                pl.BlockSpec((D, K), lambda i: (0, 0)),             # fused LUT^T (invariant)
                pl.BlockSpec((D, l_block), lambda i: (0, i)),       # pe^T slice, no batch repeat
            ],
            out_specs=pl.BlockSpec((B * D, l_block), lambda i: (0, i)),  # lane-dense stores
        ),
        compiler_params=pltpu.CompilerParams(
            dimension_semantics=("parallel",),
            vmem_limit_bytes=32 * 1024 * 1024,
        ),
    )(ids_t, lut_t, pe_l)

    # (B*D, L) -> (L, B, D): pure layout plumbing in the wrapper.
    return out_t[:, :L].T.reshape(L, B, D)


# ----------------------------- reference (plain JAX) -------------------------
def embeddings_reference(src_input, word_lut, feat_lut, w_word, w_feat, bias, pe):
    word = word_lut[src_input[:, :, 0]]                            # (L, B, D)
    feat = feat_lut[src_input[:, :, 1]]                            # (L, B, FD)
    w = jnp.concatenate([w_word, w_feat], axis=0)                  # (D+FD, D)
    cat = jnp.concatenate([word, feat], axis=-1)
    h = jnp.maximum(cat @ w + bias[0], 0.0)
    return h + pe[: src_input.shape[0], None, :]


if __name__ == "__main__":
    key = jax.random.PRNGKey(0)
    k_ids, k_fids, k_wlut, k_flut, k_ww, k_wf, k_b = jax.random.split(key, 7)

    # deterministic parameter init (nn.Embedding ~ N(0,1), padding row zeroed;
    # Linear ~ uniform)
    word_lut = jax.random.normal(k_wlut, (VOCAB, WORD_VEC), jnp.float32)
    word_lut = word_lut.at[PAD].set(0.0)
    feat_lut = jax.random.normal(k_flut, (FEAT_VOCAB, FEAT_VEC), jnp.float32)
    feat_lut = feat_lut.at[PAD].set(0.0)
    fan_in = WORD_VEC + FEAT_VEC
    bound = 1.0 / math.sqrt(fan_in)
    w_word = jax.random.uniform(k_ww, (WORD_VEC, WORD_VEC), jnp.float32, -bound, bound)
    w_feat = jax.random.uniform(k_wf, (FEAT_VEC, WORD_VEC), jnp.float32, -bound, bound)
    bias = jax.random.uniform(k_b, (1, WORD_VEC), jnp.float32, -bound, bound)
    pe = make_positional_encodings(WORD_VEC, 5000)

    # deterministic example input: (len, batch, nfeat=2) int32
    wids = jax.random.randint(k_ids, (SEQ_LEN, BATCH, 1), 0, VOCAB, jnp.int32)
    fids = jax.random.randint(k_fids, (SEQ_LEN, BATCH, 1), 0, FEAT_VOCAB, jnp.int32)
    src_input = jnp.concatenate([wids, fids], axis=-1)

    # offline table fusion (weights are static per-model) + transposed pe
    lut_t = fuse_embedding_params(word_lut, feat_lut, w_word, w_feat, bias)  # (D, V+FV)
    pe_t = pe.T                                                              # (D, 5000)

    out = embeddings_forward(src_input, lut_t, pe_t, vocab_size=VOCAB)
    out = jax.block_until_ready(out)

    ref = embeddings_reference(src_input, word_lut, feat_lut, w_word, w_feat, bias, pe)
    assert out.shape == (SEQ_LEN, BATCH, WORD_VEC)
    assert jnp.allclose(out, ref, atol=1e-4, rtol=1e-5), "mismatch vs reference"
    print("KERNEL_OK")
</pallas_src>

<mosaic_0001>
module attributes {stable_mosaic.version = 11 : i64} {
  func.func @embeddings_kernel(%arg0: i32, %arg1: memref<4x8xi32, #tpu.memory_space<vmem>>, %arg2: memref<32x96xf32, #tpu.memory_space<vmem>>, %arg3: memref<32x8xf32, #tpu.memory_space<vmem>>, %arg4: memref<64x8xf32, #tpu.memory_space<vmem>>) attributes {dimension_semantics = [#tpu.dimension_semantics<parallel>], iteration_bounds = array<i64: 1>, scalar_prefetch = 0 : i64, scratch_operands = 0 : i64, tpu.core_type = #tpu.core_type<tc>, window_params = [{transform_indices = @transform_0, window_bounds = array<i64: 4, 8>}, {pipeline_mode = #tpu.pipeline_mode<synchronous>, transform_indices = @transform_1, window_bounds = array<i64: 32, 96>}, {transform_indices = @transform_2, window_bounds = array<i64: 32, 8>}, {transform_indices = @transform_3, window_bounds = array<i64: 64, 8>}]} {
    %c0 = arith.constant 0 : index
    %c0_0 = arith.constant 0 : index
    %0 = vector.load %arg1[%c0, %c0_0] : memref<4x8xi32, #tpu.memory_space<vmem>>, vector<4x8xi32>
    %c0_1 = arith.constant 0 : index
    %c0_2 = arith.constant 0 : index
    %1 = vector.load %arg2[%c0_1, %c0_2] : memref<32x96xf32, #tpu.memory_space<vmem>>, vector<32x96xf32>
    %c0_3 = arith.constant 0 : index
    %c0_4 = arith.constant 0 : index
    %2 = vector.load %arg3[%c0_3, %c0_4] : memref<32x8xf32, #tpu.memory_space<vmem>>, vector<32x8xf32>
    %3 = tpu.iota {dimensions = array<i32: 0>} : vector<96x8xi32>
    %4 = vector.extract_strided_slice %0 {offsets = [0, 0], sizes = [1, 8], strides = [1, 1]} : vector<4x8xi32> to vector<1x8xi32>
    %5 = vector.broadcast %4 : vector<1x8xi32> to vector<96x8xi32>
    %6 = arith.cmpi eq, %3, %5 : vector<96x8xi32>
    %7 = vector.extract_strided_slice %0 {offsets = [2, 0], sizes = [1, 8], strides = [1, 1]} : vector<4x8xi32> to vector<1x8xi32>
    %8 = vector.broadcast %7 : vector<1x8xi32> to vector<96x8xi32>
    %9 = arith.cmpi eq, %3, %8 : vector<96x8xi32>
    %10 = arith.ori %6, %9 : vector<96x8xi1>
    %11 = arith.extui %10 : vector<96x8xi1> to vector<96x8xi32>
    %12 = arith.sitofp %11 : vector<96x8xi32> to vector<96x8xf32>
    %cst = arith.constant dense<0.000000e+00> : vector<32x8xf32>
    %13 = tpu.matmul %1, %12, %cst {dimension_numbers = #tpu.dot_dimension_numbers<[1], [0], [0], [1], [0, 0, 1, 1], [], []>, precision = #tpu.contract_precision<fp32>} : vector<32x96xf32>, vector<96x8xf32>, vector<32x8xf32> -> vector<32x8xf32>
    %cst_5 = arith.constant 0.000000e+00 : f32
    %14 = vector.broadcast %cst_5 : f32 to vector<32x8xf32>
    %15 = arith.maximumf %13, %14 : vector<32x8xf32>
    %16 = arith.addf %15, %2 : vector<32x8xf32>
    %17 = vector.extract_strided_slice %0 {offsets = [1, 0], sizes = [1, 8], strides = [1, 1]} : vector<4x8xi32> to vector<1x8xi32>
    %18 = vector.broadcast %17 : vector<1x8xi32> to vector<96x8xi32>
    %19 = arith.cmpi eq, %3, %18 : vector<96x8xi32>
    %20 = vector.extract_strided_slice %0 {offsets = [3, 0], sizes = [1, 8], strides = [1, 1]} : vector<4x8xi32> to vector<1x8xi32>
    %21 = vector.broadcast %20 : vector<1x8xi32> to vector<96x8xi32>
    %22 = arith.cmpi eq, %3, %21 : vector<96x8xi32>
    %23 = arith.ori %19, %22 : vector<96x8xi1>
    %24 = arith.extui %23 : vector<96x8xi1> to vector<96x8xi32>
    %25 = arith.sitofp %24 : vector<96x8xi32> to vector<96x8xf32>
    %cst_6 = arith.constant dense<0.000000e+00> : vector<32x8xf32>
    %26 = tpu.matmul %1, %25, %cst_6 {dimension_numbers = #tpu.dot_dimension_numbers<[1], [0], [0], [1], [0, 0, 1, 1], [], []>, precision = #tpu.contract_precision<fp32>} : vector<32x96xf32>, vector<96x8xf32>, vector<32x8xf32> -> vector<32x8xf32>
    %cst_7 = arith.constant 0.000000e+00 : f32
    %27 = vector.broadcast %cst_7 : f32 to vector<32x8xf32>
    %28 = arith.maximumf %26, %27 : vector<32x8xf32>
    %29 = arith.addf %28, %2 : vector<32x8xf32>
    %30 = tpu.concatenate %16, %29 in 0 : vector<32x8xf32>, vector<32x8xf32> -> vector<64x8xf32>
    %c0_8 = arith.constant 0 : index
    %c0_9 = arith.constant 0 : index
    %31 = vector.load %arg4[%c0_8, %c0_9] : memref<64x8xf32, #tpu.memory_space<vmem>>, vector<64x8xf32>
    tpu.vector_store %arg4[%c0_8, %c0_9], %30 {strides = array<i32>} : memref<64x8xf32, #tpu.memory_space<vmem>>, vector<64x8xf32>,
    return
  }
  func.func @transform_0(%arg0: i32) -> (i32, i32) {
    %c0_i32 = arith.constant 0 : i32
    %c0_i32_0 = arith.constant 0 : i32
    return %c0_i32, %arg0 : i32, i32
  }
  func.func @transform_1(%arg0: i32) -> (i32, i32) {
    %c0_i32 = arith.constant 0 : i32
    %c0_i32_0 = arith.constant 0 : i32
    %c0_i32_1 = arith.constant 0 : i32
    return %c0_i32, %c0_i32_0 : i32, i32
  }
  func.func @transform_2(%arg0: i32) -> (i32, i32) {
    %c0_i32 = arith.constant 0 : i32
    %c0_i32_0 = arith.constant 0 : i32
    return %c0_i32, %arg0 : i32, i32
  }
  func.func @transform_3(%arg0: i32) -> (i32, i32) {
    %c0_i32 = arith.constant 0 : i32
    %c0_i32_0 = arith.constant 0 : i32
    return %c0_i32, %arg0 : i32, i32
  }
}

</mosaic_0001>

<llo_original>
// kernel: embeddings_forward.1
$region0: #{embeddings_forward.1}
  #allocation0 [shape = 'u32[]', space=smem, size = 0x4, offset = 0x4, fixed_abs, tag = 'smem constant byte address 0x4 - core index']
  #allocation1 [shape = 'u32[144,128]{1,0:T(1,128)}', space=vmem, size = 0x12000, scoped, tag = 'internal scratch']
  %s0 = inlined_call_operand.vmem [shape: s32[4,8], index: 0, kind: input, shape index: {}]
  %s1 = inlined_call_operand.vmem [shape: f32[32,96], index: 1, kind: input, shape index: {}]
  %s2 = inlined_call_operand.vmem [shape: f32[32,8], index: 2, kind: input, shape index: {}]
  %s3 = inlined_call_operand.vmem [shape: f32[64,8], index: 3, kind: output, shape index: {}]
  %s4 = sld [smem:[#allocation0]]
  $region22: #{embeddings_forward.1} parent=0
    _
  %s6 = ssub.s32 1, %s4
  %s7 = scalar_select 0, %s6, %s4
  // Predicated region
  $region2: #{embeddings_forward.1} parent=0 // pred_check
    _
  $region3: #{embeddings_forward.1} parent=0 // pred_check_branch
    %9 = sbr.rel (0) target = $region5
  $region4: #{embeddings_forward.1} parent=0 // pred_region
    _
  $region5: #{embeddings_forward.1} parent=0 // pred_fallthru
    _
  // Predicated region
  $region6: #{embeddings_forward.1} parent=0 // pred_check
    _
  $region7: #{embeddings_forward.1} parent=0 // pred_check_branch
    %11 = sbr.rel (0) target = $region9
  $region8: #{embeddings_forward.1} parent=0 // pred_region
    _
  $region9: #{embeddings_forward.1} parent=0 // pred_fallthru
    _
  // Predicated region
  $region10: #{embeddings_forward.1} parent=0 // pred_check
    _
  $region11: #{embeddings_forward.1} parent=0 // pred_check_branch
    %13 = sbr.rel (0) target = $region13
  $region12: #{embeddings_forward.1} parent=0 // pred_region
    _
  $region13: #{embeddings_forward.1} parent=0 // pred_fallthru
    _
  %v14 = vld [vmem:[%s0] sm:$0xf]
  %v15 = vld [vmem:[%s1] sm:$0xff]
  %v16 = vld [vmem:[%s1 + $0x8] sm:$0xff]
  %v17 = vld [vmem:[%s1 + $0x10] sm:$0xff]
  %v18 = vld [vmem:[%s1 + $0x18] sm:$0xff]
  %v19 = vld [vmem:[%s2] sm:$0xff]
  %v20 = vld [vmem:[%s2 + $0x8] sm:$0xff]
  %v21 = vld [vmem:[%s2 + $0x10] sm:$0xff]
  %v22 = vld [vmem:[%s2 + $0x18] sm:$0xff]
  %v23 = vlaneseq
  %v24 = vshrl.u32 %v23, 7
  %v25 = vadd.s32 %v24, 8
  %v26 = vadd.s32 %v24, 16
  %v27 = vadd.s32 %v24, 24
  %v28 = vadd.s32 %v24, 32
  %v29 = vadd.s32 %v24, 40
  %v30 = vadd.s32 %v24, 48
  %v31 = vadd.s32 %v24, 56
  %v32 = vadd.s32 %v24, 64
  %v33 = vadd.s32 %v24, 72
  %v34 = vadd.s32 %v24, 80
  %v35 = vadd.s32 %v24, 88
  %v36 = vlaneseq
  %v37 = vshrl.u32 %v36, 7
  %v38 = vsub.s32 0, %v37
  %v39 = vrot.slane %v14, %v38
  %vm40 = vcmp.eq.s32.totalorder %v24, %v39
  %vm41 = vcmp.eq.s32.totalorder %v25, %v39
  %vm42 = vcmp.eq.s32.totalorder %v26, %v39
  %vm43 = vcmp.eq.s32.totalorder %v27, %v39
  %vm44 = vcmp.eq.s32.totalorder %v28, %v39
  %vm45 = vcmp.eq.s32.totalorder %v29, %v39
  %vm46 = vcmp.eq.s32.totalorder %v30, %v39
  %vm47 = vcmp.eq.s32.totalorder %v31, %v39
  %vm48 = vcmp.eq.s32.totalorder %v32, %v39
  %vm49 = vcmp.eq.s32.totalorder %v33, %v39
  %vm50 = vcmp.eq.s32.totalorder %v34, %v39
  %vm51 = vcmp.eq.s32.totalorder %v35, %v39
  %v52 = vlaneseq
  %v53 = vshrl.u32 %v52, 7
  %v54 = vsub.s32 2, %v53
  %v55 = vrot.slane %v14, %v54
  %vm56 = vcmp.eq.s32.totalorder %v24, %v55
  %vm57 = vcmp.eq.s32.totalorder %v25, %v55
  %vm58 = vcmp.eq.s32.totalorder %v26, %v55
  %vm59 = vcmp.eq.s32.totalorder %v27, %v55
  %vm60 = vcmp.eq.s32.totalorder %v28, %v55
  %vm61 = vcmp.eq.s32.totalorder %v29, %v55
  %vm62 = vcmp.eq.s32.totalorder %v30, %v55
  %vm63 = vcmp.eq.s32.totalorder %v31, %v55
  %vm64 = vcmp.eq.s32.totalorder %v32, %v55
  %vm65 = vcmp.eq.s32.totalorder %v33, %v55
  %vm66 = vcmp.eq.s32.totalorder %v34, %v55
  %vm67 = vcmp.eq.s32.totalorder %v35, %v55
  %vm68 = vmor %vm40, %vm56
  %vm69 = vmor %vm41, %vm57
  %vm70 = vmor %vm42, %vm58
  %vm71 = vmor %vm43, %vm59
  %vm72 = vmor %vm44, %vm60
  %vm73 = vmor %vm45, %vm61
  %vm74 = vmor %vm46, %vm62
  %vm75 = vmor %vm47, %vm63
  %vm76 = vmor %vm48, %vm64
  %vm77 = vmor %vm49, %vm65
  %vm78 = vmor %vm50, %vm66
  %vm79 = vmor %vm51, %vm67
  %v80 = vsel %vm68, 1, 0
  %v81 = vsel %vm69, 1, 0
  %v82 = vsel %vm70, 1, 0
  %v83 = vsel %vm71, 1, 0
  %v84 = vsel %vm72, 1, 0
  %v85 = vsel %vm73, 1, 0
  %v86 = vsel %vm74, 1, 0
  %v87 = vsel %vm75, 1, 0
  %v88 = vsel %vm76, 1, 0
  %v89 = vsel %vm77, 1, 0
  %v90 = vsel %vm78, 1, 0
  %v91 = vsel %vm79, 1, 0
  %v92 = vcvt.s32.f32 %v80
  %v93 = vcvt.s32.f32 %v81
  %v94 = vcvt.s32.f32 %v82
  %v95 = vcvt.s32.f32 %v83
  %v96 = vcvt.s32.f32 %v84
  %v97 = vcvt.s32.f32 %v85
  %v98 = vcvt.s32.f32 %v86
  %v99 = vcvt.s32.f32 %v87
  %v100 = vcvt.s32.f32 %v88
  %v101 = vcvt.s32.f32 %v89
  %v102 = vcvt.s32.f32 %v90
  %v103 = vcvt.s32.f32 %v91
  %vm104 = vcmask 785408
  %v106 = vsel %vm104, %v15, 0
  %v109 = vsel %vm104, %v16, 0
  %v112 = vsel %vm104, %v17, 0
  %v115 = vsel %vm104, %v18, 0
  %117 = vmatprep.subr.mxu0 0.0
  %118 = vmatpush1.msra.mxu0 0.0
  %119 = vmatprep.subr.mxu0 0.0
  %120 = vmatpush1.msra.mxu0 0.0
  %121 = vmatprep.subr.mxu0 0.0
  %122 = vmatpush1.msra.mxu0 0.0
  %123 = vmatprep.subr.mxu0 0.0
  %124 = vmatpush1.msra.mxu0 0.0
  %125 = vmatprep.subr.mxu0 0.0
  %v126 = vand.u32 %v103, 4294901760
  %127 = vmatpush1.msra.mxu0 %v126
  %128 = vmatprep.subr.mxu0 0.0
  %v129 = vand.u32 %v102, 4294901760
  %130 = vmatpush1.msra.mxu0 %v129
  %131 = vmatprep.subr.mxu0 0.0
  %v132 = vand.u32 %v101, 4294901760
  %133 = vmatpush1.msra.mxu0 %v132
  %134 = vmatprep.subr.mxu0 0.0
  %v135 = vand.u32 %v100, 4294901760
  %136 = vmatpush1.msra.mxu0 %v135
  %137 = vmatprep.subr.mxu0 0.0
  %v138 = vand.u32 %v99, 4294901760
  %139 = vmatpush1.msra.mxu0 %v138
  %140 = vmatprep.subr.mxu0 0.0
  %v141 = vand.u32 %v98, 4294901760
  %142 = vmatpush1.msra.mxu0 %v141
  %143 = vmatprep.subr.mxu0 0.0
  %v144 = vand.u32 %v97, 4294901760
  %145 = vmatpush1.msra.mxu0 %v144
  %146 = vmatprep.subr.mxu0 0.0
  %v147 = vand.u32 %v96, 4294901760
  %148 = vmatpush1.msra.mxu0 %v147
  %149 = vmatprep.subr.mxu0 0.0
  %v150 = vand.u32 %v95, 4294901760
  %151 = vmatpush1.msra.mxu0 %v150
  %152 = vmatprep.subr.mxu0 0.0
  %v153 = vand.u32 %v94, 4294901760
  %154 = vmatpush1.msra.mxu0 %v153
  %155 = vmatprep.subr.mxu0 0.0
  %v156 = vand.u32 %v93, 4294901760
  %157 = vmatpush1.msra.mxu0 %v156
  %158 = vmatprep.subr.mxu0 0.0
  %v159 = vand.u32 %v92, 4294901760
  %160 = vmatpush1.msra.mxu0 %v159
  %161 = vmatprep.subr.mxu0 0.0
  %162 = vmatpush2.msra.mxu0 0.0
  %163 = vmatprep.subr.mxu0 0.0
  %164 = vmatpush2.msra.mxu0 0.0
  %165 = vmatprep.subr.mxu0 0.0
  %166 = vmatpush2.msra.mxu0 0.0
  %167 = vmatprep.subr.mxu0 0.0
  %168 = vmatpush2.msra.mxu0 0.0
  %169 = vmatprep.subr.mxu0 0.0
  %170 = vmatpush2.msra.mxu0 0.0
  %171 = vmatprep.subr.mxu0 0.0
  %172 = vmatpush2.msra.mxu0 0.0
  %173 = vmatprep.subr.mxu0 0.0
  %174 = vmatpush2.msra.mxu0 0.0
  %175 = vmatprep.subr.mxu0 0.0
  %176 = vmatpush2.msra.mxu0 0.0
  %177 = vmatprep.subr.mxu0 0.0
  %178 = vmatpush2.msra.mxu0 0.0
  %179 = vmatprep.subr.mxu0 0.0
  %180 = vmatpush2.msra.mxu0 0.0
  %181 = vmatprep.subr.mxu0 0.0
  %182 = vmatpush2.msra.mxu0 0.0
  %183 = vmatprep.subr.mxu0 0.0
  %184 = vmatpush2.msra.mxu0 0.0
  %185 = vmatprep.subr.mxu0 0.0
  %186 = vmatpush2.msra.mxu0 0.0
  %187 = vmatprep.subr.mxu0 0.0
  %188 = vmatpush2.msra.mxu0 0.0
  %189 = vmatprep.subr.mxu0 0.0
  %190 = vmatpush2.msra.mxu0 0.0
  %191 = vmatprep.subr.mxu0 0.0
  %192 = vmatpush2.msra.mxu0 0.0
  %193 = vmatprep.mubr.f32.mxu0 0.0
  %v194 = vand.u32 %v106, 4294901760
  %v195 = vsub.f32 %v106, %v194
  %v196 = vand.u32 %v195, 4294901760
  %v197 = vsub.f32 %v195, %v196
  %v198 = vand.u32 %v197, 4294901760
  %199 = vmatmul.mubr.f32.gmra.mxu0 %v198
  %v200 = vpop.f32.mrf.mxu0
  %v201 = vadd.f32 0.0, %v200
  %v202 = vpop.f32.mrf.mxu0
  %203 = vmatprep.mubr.f32.mxu0 0.0
  %v204 = vand.u32 %v109, 4294901760
  %v205 = vsub.f32 %v109, %v204
  %v206 = vand.u32 %v205, 4294901760
  %v207 = vsub.f32 %v205, %v206
  %v208 = vand.u32 %v207, 4294901760
  %209 = vmatmul.mubr.f32.gmra.mxu0 %v208
  %v210 = vpop.f32.mrf.mxu0
  %v211 = vadd.f32 0.0, %v210
  %v212 = vpop.f32.mrf.mxu0
  %213 = vmatprep.mubr.f32.mxu0 0.0
  %v214 = vand.u32 %v112, 4294901760
  %v215 = vsub.f32 %v112, %v214
  %v216 = vand.u32 %v215, 4294901760
  %v217 = vsub.f32 %v215, %v216
  %v218 = vand.u32 %v217, 4294901760
  %219 = vmatmul.mubr.f32.gmra.mxu0 %v218
  %v220 = vpop.f32.mrf.mxu0
  %v221 = vadd.f32 0.0, %v220
  %v222 = vpop.f32.mrf.mxu0
  %223 = vmatprep.mubr.f32.mxu0 0.0
  %v224 = vand.u32 %v115, 4294901760
  %v225 = vsub.f32 %v115, %v224
  %v226 = vand.u32 %v225, 4294901760
  %v227 = vsub.f32 %v225, %v226
  %v228 = vand.u32 %v227, 4294901760
  %229 = vmatmul.mubr.f32.gmra.mxu0 %v228
  %v230 = vpop.f32.mrf.mxu0
  %v231 = vadd.f32 0.0, %v230
  %v232 = vpop.f32.mrf.mxu0
  %233 = vdwg.mxu0
  %234 = vmatprep.subr.mxu0 0.0
  %235 = vmatpush1.msra.mxu0 0.0
  %236 = vmatprep.subr.mxu0 0.0
  %237 = vmatpush1.msra.mxu0 0.0
  %238 = vmatprep.subr.mxu0 0.0
  %239 = vmatpush1.msra.mxu0 0.0
  %240 = vmatprep.subr.mxu0 0.0
  %241 = vmatpush1.msra.mxu0 0.0
  %242 = vmatprep.subr.mxu0 0.0
  %v243 = vand.u32 %v103, 4294901760
  %v244 = vsub.f32 %v103, %v243
  %v245 = vand.u32 %v244, 4294901760
  %v246 = vsub.f32 %v244, %v245
  %v247 = vand.u32 %v246, 4294901760
  %248 = vmatpush1.msra.mxu0 %v247
  %249 = vmatprep.subr.mxu0 0.0
  %v250 = vand.u32 %v102, 4294901760
  %v251 = vsub.f32 %v102, %v250
  %v252 = vand.u32 %v251, 4294901760
  %v253 = vsub.f32 %v251, %v252
  %v254 = vand.u32 %v253, 4294901760
  %255 = vmatpush1.msra.mxu0 %v254
  %256 = vmatprep.subr.mxu0 0.0
  %v257 = vand.u32 %v101, 4294901760
  %v258 = vsub.f32 %v101, %v257
  %v259 = vand.u32 %v258, 4294901760
  %v260 = vsub.f32 %v258, %v259
  %v261 = vand.u32 %v260, 4294901760
  %262 = vmatpush1.msra.mxu0 %v261
  %263 = vmatprep.subr.mxu0 0.0
  %v264 = vand.u32 %v100, 4294901760
  %v265 = vsub.f32 %v100, %v264
  %v266 = vand.u32 %v265, 4294901760
  %v267 = vsub.f32 %v265, %v266
  %v268 = vand.u32 %v267, 4294901760
  %269 = vmatpush1.msra.mxu0 %v268
  %270 = vmatprep.subr.mxu0 0.0
  %v271 = vand.u32 %v99, 4294901760
  %v272 = vsub.f32 %v99, %v271
  %v273 = vand.u32 %v272, 4294901760
  %v274 = vsub.f32 %v272, %v273
  %v275 = vand.u32 %v274, 4294901760
  %276 = vmatpush1.msra.mxu0 %v275
  %277 = vmatprep.subr.mxu0 0.0
  %v278 = vand.u32 %v98, 4294901760
  %v279 = vsub.f32 %v98, %v278
  %v280 = vand.u32 %v279, 4294901760
  %v281 = vsub.f32 %v279, %v280
  %v282 = vand.u32 %v281, 4294901760
  %283 = vmatpush1.msra.mxu0 %v282
  %284 = vmatprep.subr.mxu0 0.0
  %v285 = vand.u32 %v97, 4294901760
  %v286 = vsub.f32 %v97, %v285
  %v287 = vand.u32 %v286, 4294901760
  %v288 = vsub.f32 %v286, %v287
  %v289 = vand.u32 %v288, 4294901760
  %290 = vmatpush1.msra.mxu0 %v289
  %291 = vmatprep.subr.mxu0 0.0
  %v292 = vand.u32 %v96, 4294901760
  %v293 = vsub.f32 %v96, %v292
  %v294 = vand.u32 %v293, 4294901760
  %v295 = vsub.f32 %v293, %v294
  %v296 = vand.u32 %v295, 4294901760
  %297 = vmatpush1.msra.mxu0 %v296
  %298 = vmatprep.subr.mxu0 0.0
  %v299 = vand.u32 %v95, 4294901760
  %v300 = vsub.f32 %v95, %v299
  %v301 = vand.u32 %v300, 4294901760
  %v302 = vsub.f32 %v300, %v301
  %v303 = vand.u32 %v302, 4294901760
  %304 = vmatpush1.msra.mxu0 %v303
  %305 = vmatprep.subr.mxu0 0.0
  %v306 = vand.u32 %v94, 4294901760
  %v307 = vsub.f32 %v94, %v306
  %v308 = vand.u32 %v307, 4294901760
  %v309 = vsub.f32 %v307, %v308
  %v310 = vand.u32 %v309, 4294901760
  %311 = vmatpush1.msra.mxu0 %v310
  %312 = vmatprep.subr.mxu0 0.0
  %v313 = vand.u32 %v93, 4294901760
  %v314 = vsub.f32 %v93, %v313
  %v315 = vand.u32 %v314, 4294901760
  %v316 = vsub.f32 %v314, %v315
  %v317 = vand.u32 %v316, 4294901760
  %318 = vmatpush1.msra.mxu0 %v317
  %319 = vmatprep.subr.mxu0 0.0
  %v320 = vand.u32 %v92, 4294901760
  %v321 = vsub.f32 %v92, %v320
  %v322 = vand.u32 %v321, 4294901760
  %v323 = vsub.f32 %v321, %v322
  %v324 = vand.u32 %v323, 4294901760
  %325 = vmatpush1.msra.mxu0 %v324
  %326 = vmatprep.subr.mxu0 0.0
  %327 = vmatpush2.msra.mxu0 0.0
  %328 = vmatprep.subr.mxu0 0.0
  %329 = vmatpush2.msra.mxu0 0.0
  %330 = vmatprep.subr.mxu0 0.0
  %331 = vmatpush2.msra.mxu0 0.0
  %332 = vmatprep.subr.mxu0 0.0
  %333 = vmatpush2.msra.mxu0 0.0
  %334 = vmatprep.subr.mxu0 0.0
  %335 = vmatpush2.msra.mxu0 0.0
  %336 = vmatprep.subr.mxu0 0.0
  %337 = vmatpush2.msra.mxu0 0.0
  %338 = vmatprep.subr.mxu0 0.0
  %339 = vmatpush2.msra.mxu0 0.0
  %340 = vmatprep.subr.mxu0 0.0
  %341 = vmatpush2.msra.mxu0 0.0
  %342 = vmatprep.subr.mxu0 0.0
  %343 = vmatpush2.msra.mxu0 0.0
  %344 = vmatprep.subr.mxu0 0.0
  %345 = vmatpush2.msra.mxu0 0.0
  %346 = vmatprep.subr.mxu0 0.0
  %347 = vmatpush2.msra.mxu0 0.0
  %348 = vmatprep.subr.mxu0 0.0
  %349 = vmatpush2.msra.mxu0 0.0
  %350 = vmatprep.subr.mxu0 0.0
  %351 = vmatpush2.msra.mxu0 0.0
  %352 = vmatprep.subr.mxu0 0.0
  %353 = vmatpush2.msra.mxu0 0.0
  %354 = vmatprep.subr.mxu0 0.0
  %355 = vmatpush2.msra.mxu0 0.0
  %356 = vmatprep.subr.mxu0 0.0
  %357 = vmatpush2.msra.mxu0 0.0
  %358 = vmatprep.mubr.f32.mxu0 0.0
  %v359 = vand.u32 %v106, 4294901760
  %360 = vmatmul.mubr.f32.gmra.mxu0 %v359
  %v361 = vpop.f32.mrf.mxu0
  %v362 = vadd.f32 %v201, %v361
  %v363 = vpop.f32.mrf.mxu0
  %364 = vmatprep.mubr.f32.mxu0 0.0
  %v365 = vand.u32 %v109, 4294901760
  %366 = vmatmul.mubr.f32.gmra.mxu0 %v365
  %v367 = vpop.f32.mrf.mxu0
  %v368 = vadd.f32 %v211, %v367
  %v369 = vpop.f32.mrf.mxu0
  %370 = vmatprep.mubr.f32.mxu0 0.0
  %v371 = vand.u32 %v112, 4294901760
  %372 = vmatmul.mubr.f32.gmra.mxu0 %v371
  %v373 = vpop.f32.mrf.mxu0
  %v374 = vadd.f32 %v221, %v373
  %v375 = vpop.f32.mrf.mxu0
  %376 = vmatprep.mubr.f32.mxu0 0.0
  %v377 = vand.u32 %v115, 4294901760
  %378 = vmatmul.mubr.f32.gmra.mxu0 %v377
  %v379 = vpop.f32.mrf.mxu0
  %v380 = vadd.f32 %v231, %v379
  %v381 = vpop.f32.mrf.mxu0
  %382 = vdwg.mxu0
  %383 = vmatprep.subr.mxu0 0.0
  %384 = vmatpush1.msra.mxu0 0.0
  %385 = vmatprep.subr.mxu0 0.0
  %386 = vmatpush1.msra.mxu0 0.0
  %387 = vmatprep.subr.mxu0 0.0
  %388 = vmatpush1.msra.mxu0 0.0
  %389 = vmatprep.subr.mxu0 0.0
  %390 = vmatpush1.msra.mxu0 0.0
  %391 = vmatprep.subr.mxu0 0.0
  %v392 = vand.u32 %v103, 4294901760
  %v393 = vsub.f32 %v103, %v392
  %394 = vmatpush1.msra.mxu0 %v393
  %395 = vmatprep.subr.mxu0 0.0
  %v396 = vand.u32 %v102, 4294901760
  %v397 = vsub.f32 %v102, %v396
  %398 = vmatpush1.msra.mxu0 %v397
  %399 = vmatprep.subr.mxu0 0.0
  %v400 = vand.u32 %v101, 4294901760
  %v401 = vsub.f32 %v101, %v400
  %402 = vmatpush1.msra.mxu0 %v401
  %403 = vmatprep.subr.mxu0 0.0
  %v404 = vand.u32 %v100, 4294901760
  %v405 = vsub.f32 %v100, %v404
  %406 = vmatpush1.msra.mxu0 %v405
  %407 = vmatprep.subr.mxu0 0.0
  %v408 = vand.u32 %v99, 4294901760
  %v409 = vsub.f32 %v99, %v408
  %410 = vmatpush1.msra.mxu0 %v409
  %411 = vmatprep.subr.mxu0 0.0
  %v412 = vand.u32 %v98, 4294901760
  %v413 = vsub.f32 %v98, %v412
  %414 = vmatpush1.msra.mxu0 %v413
  %415 = vmatprep.subr.mxu0 0.0
  %v416 = vand.u32 %v97, 4294901760
  %v417 = vsub.f32 %v97, %v416
  %418 = vmatpush1.msra.mxu0 %v417
  %419 = vmatprep.subr.mxu0 0.0
  %v420 = vand.u32 %v96, 4294901760
  %v421 = vsub.f32 %v96, %v420
  %422 = vmatpush1.msra.mxu0 %v421
  %423 = vmatprep.subr.mxu0 0.0
  %v424 = vand.u32 %v95, 4294901760
  %v425 = vsub.f32 %v95, %v424
  %426 = vmatpush1.msra.mxu0 %v425
  %427 = vmatprep.subr.mxu0 0.0
  %v428 = vand.u32 %v94, 4294901760
  %v429 = vsub.f32 %v94, %v428
  %430 = vmatpush1.msra.mxu0 %v429
  %431 = vmatprep.subr.mxu0 0.0
  %v432 = vand.u32 %v93, 4294901760
  %v433 = vsub.f32 %v93, %v432
  %434 = vmatpush1.msra.mxu0 %v433
  %435 = vmatprep.subr.mxu0 0.0
  %v436 = vand.u32 %v92, 4294901760
  %v437 = vsub.f32 %v92, %v436
  %438 = vmatpush1.msra.mxu0 %v437
  %439 = vmatprep.subr.mxu0 0.0
  %440 = vmatpush2.msra.mxu0 0.0
  %441 = vmatprep.subr.mxu0 0.0
  %442 = vmatpush2.msra.mxu0 0.0
  %443 = vmatprep.subr.mxu0 0.0
  %444 = vmatpush2.msra.mxu0 0.0
  %445 = vmatprep.subr.mxu0 0.0
  %446 = vmatpush2.msra.mxu0 0.0
  %447 = vmatprep.subr.mxu0 0.0
  %448 = vmatpush2.msra.mxu0 0.0
  %449 = vmatprep.subr.mxu0 0.0
  %450 = vmatpush2.msra.mxu0 0.0
  %451 = vmatprep.subr.mxu0 0.0
  %452 = vmatpush2.msra.mxu0 0.0
  %453 = vmatprep.subr.mxu0 0.0
  %454 = vmatpush2.msra.mxu0 0.0
  %455 = vmatprep.subr.mxu0 0.0
  %456 = vmatpush2.msra.mxu0 0.0
  %457 = vmatprep.subr.mxu0 0.0
  %458 = vmatpush2.msra.mxu0 0.0
  %459 = vmatprep.subr.mxu0 0.0
  %460 = vmatpush2.msra.mxu0 0.0
  %461 = vmatprep.subr.mxu0 0.0
  %462 = vmatpush2.msra.mxu0 0.0
  %463 = vmatprep.subr.mxu0 0.0
  %464 = vmatpush2.msra.mxu0 0.0
  %465 = vmatprep.subr.mxu0 0.0
  %466 = vmatpush2.msra.mxu0 0.0
  %467 = vmatprep.subr.mxu0 0.0
  %468 = vmatpush2.msra.mxu0 0.0
  %469 = vmatprep.subr.mxu0 0.0
  %470 = vmatpush2.msra.mxu0 0.0
  %471 = vmatprep.mubr.f32.mxu0 0.0
  %v472 = vand.u32 %v106, 4294901760
  %v473 = vsub.f32 %v106, %v472
  %474 = vmatmul.mubr.f32.gmra.mxu0 %v473
  %v475 = vpop.f32.mrf.mxu0
  %v476 = vadd.f32 %v362, %v475
  %v477 = vpop.f32.mrf.mxu0
  %478 = vmatprep.mubr.f32.mxu0 0.0
  %v479 = vand.u32 %v109, 4294901760
  %v480 = vsub.f32 %v109, %v479
  %481 = vmatmul.mubr.f32.gmra.mxu0 %v480
  %v482 = vpop.f32.mrf.mxu0
  %v483 = vadd.f32 %v368, %v482
  %v484 = vpop.f32.mrf.mxu0
  %485 = vmatprep.mubr.f32.mxu0 0.0
  %v486 = vand.u32 %v112, 4294901760
  %v487 = vsub.f32 %v112, %v486
  %488 = vmatmul.mubr.f32.gmra.mxu0 %v487
  %v489 = vpop.f32.mrf.mxu0
  %v490 = vadd.f32 %v374, %v489
  %v491 = vpop.f32.mrf.mxu0
  %492 = vmatprep.mubr.f32.mxu0 0.0
  %v493 = vand.u32 %v115, 4294901760
  %v494 = vsub.f32 %v115, %v493
  %495 = vmatmul.mubr.f32.gmra.mxu0 %v494
  %v496 = vpop.f32.mrf.mxu0
  %v497 = vadd.f32 %v380, %v496
  %v498 = vpop.f32.mrf.mxu0
  %499 = vdwg.mxu0
  %500 = vmatprep.subr.mxu0 0.0
  %501 = vmatpush1.msra.mxu0 0.0
  %502 = vmatprep.subr.mxu0 0.0
  %503 = vmatpush1.msra.mxu0 0.0
  %504 = vmatprep.subr.mxu0 0.0
  %505 = vmatpush1.msra.mxu0 0.0
  %506 = vmatprep.subr.mxu0 0.0
  %507 = vmatpush1.msra.mxu0 0.0
  %508 = vmatprep.subr.mxu0 0.0
  %v509 = vand.u32 %v103, 4294901760
  %510 = vmatpush1.msra.mxu0 %v509
  %511 = vmatprep.subr.mxu0 0.0
  %v512 = vand.u32 %v102, 4294901760
  %513 = vmatpush1.msra.mxu0 %v512
  %514 = vmatprep.subr.mxu0 0.0
  %v515 = vand.u32 %v101, 4294901760
  %516 = vmatpush1.msra.mxu0 %v515
  %517 = vmatprep.subr.mxu0 0.0
  %v518 = vand.u32 %v100, 4294901760
  %519 = vmatpush1.msra.mxu0 %v518
  %520 = vmatprep.subr.mxu0 0.0
  %v521 = vand.u32 %v99, 4294901760
  %522 = vmatpush1.msra.mxu0 %v521
  %523 = vmatprep.subr.mxu0 0.0
  %v524 = vand.u32 %v98, 4294901760
  %525 = vmatpush1.msra.mxu0 %v524
  %526 = vmatprep.subr.mxu0 0.0
  %v527 = vand.u32 %v97, 4294901760
  %528 = vmatpush1.msra.mxu0 %v527
  %529 = vmatprep.subr.mxu0 0.0
  %v530 = vand.u32 %v96, 4294901760
  %531 = vmatpush1.msra.mxu0 %v530
  %532 = vmatprep.subr.mxu0 0.0
  %v533 = vand.u32 %v95, 4294901760
  %534 = vmatpush1.msra.mxu0 %v533
  %535 = vmatprep.subr.mxu0 0.0
  %v536 = vand.u32 %v94, 4294901760
  %537 = vmatpush1.msra.mxu0 %v536
  %538 = vmatprep.subr.mxu0 0.0
  %v539 = vand.u32 %v93, 4294901760
  %540 = vmatpush1.msra.mxu0 %v539
  %541 = vmatprep.subr.mxu0 0.0
  %v542 = vand.u32 %v92, 4294901760
  %543 = vmatpush1.msra.mxu0 %v542
  %544 = vmatprep.subr.mxu0 0.0
  %545 = vmatpush2.msra.mxu0 0.0
  %546 = vmatprep.subr.mxu0 0.0
  %547 = vmatpush2.msra.mxu0 0.0
  %548 = vmatprep.subr.mxu0 0.0
  %549 = vmatpush2.msra.mxu0 0.0
  %550 = vmatprep.subr.mxu0 0.0
  %551 = vmatpush2.msra.mxu0 0.0
  %552 = vmatprep.subr.mxu0 0.0
  %553 = vmatpush2.msra.mxu0 0.0
  %554 = vmatprep.subr.mxu0 0.0
  %555 = vmatpush2.msra.mxu0 0.0
  %556 = vmatprep.subr.mxu0 0.0
  %557 = vmatpush2.msra.mxu0 0.0
  %558 = vmatprep.subr.mxu0 0.0
  %559 = vmatpush2.msra.mxu0 0.0
  %560 = vmatprep.subr.mxu0 0.0
  %561 = vmatpush2.msra.mxu0 0.0
  %562 = vmatprep.subr.mxu0 0.0
  %563 = vmatpush2.msra.mxu0 0.0
  %564 = vmatprep.subr.mxu0 0.0
  %565 = vmatpush2.msra.mxu0 0.0
  %566 = vmatprep.subr.mxu0 0.0
  %567 = vmatpush2.msra.mxu0 0.0
  %568 = vmatprep.subr.mxu0 0.0
  %569 = vmatpush2.msra.mxu0 0.0
  %570 = vmatprep.subr.mxu0 0.0
  %571 = vmatpush2.msra.mxu0 0.0
  %572 = vmatprep.subr.mxu0 0.0
  %573 = vmatpush2.msra.mxu0 0.0
  %574 = vmatprep.subr.mxu0 0.0
  %575 = vmatpush2.msra.mxu0 0.0
  %576 = vmatprep.mubr.f32.mxu0 0.0
  %v577 = vand.u32 %v106, 4294901760
  %v578 = vsub.f32 %v106, %v577
  %v579 = vand.u32 %v578, 4294901760
  %580 = vmatmul.mubr.f32.gmra.mxu0 %v579
  %v581 = vpop.f32.mrf.mxu0
  %v582 = vadd.f32 %v476, %v581
  %v583 = vpop.f32.mrf.mxu0
  %584 = vmatprep.mubr.f32.mxu0 0.0
  %v585 = vand.u32 %v109, 4294901760
  %v586 = vsub.f32 %v109, %v585
  %v587 = vand.u32 %v586, 4294901760
  %588 = vmatmul.mubr.f32.gmra.mxu0 %v587
  %v589 = vpop.f32.mrf.mxu0
  %v590 = vadd.f32 %v483, %v589
  %v591 = vpop.f32.mrf.mxu0
  %592 = vmatprep.mubr.f32.mxu0 0.0
  %v593 = vand.u32 %v112, 4294901760
  %v594 = vsub.f32 %v112, %v593
  %v595 = vand.u32 %v594, 4294901760
  %596 = vmatmul.mubr.f32.gmra.mxu0 %v595
  %v597 = vpop.f32.mrf.mxu0
  %v598 = vadd.f32 %v490, %v597
  %v599 = vpop.f32.mrf.mxu0
  %600 = vmatprep.mubr.f32.mxu0 0.0
  %v601 = vand.u32 %v115, 4294901760
  %v602 = vsub.f32 %v115, %v601
  %v603 = vand.u32 %v602, 4294901760
  %604 = vmatmul.mubr.f32.gmra.mxu0 %v603
  %v605 = vpop.f32.mrf.mxu0
  %v606 = vadd.f32 %v497, %v605
  %v607 = vpop.f32.mrf.mxu0
  %608 = vdwg.mxu0
  %609 = vmatprep.subr.mxu0 0.0
  %610 = vmatpush1.msra.mxu0 0.0
  %611 = vmatprep.subr.mxu0 0.0
  %612 = vmatpush1.msra.mxu0 0.0
  %613 = vmatprep.subr.mxu0 0.0
  %614 = vmatpush1.msra.mxu0 0.0
  %615 = vmatprep.subr.mxu0 0.0
  %616 = vmatpush1.msra.mxu0 0.0
  %617 = vmatprep.subr.mxu0 0.0
  %v618 = vand.u32 %v103, 4294901760
  %v619 = vsub.f32 %v103, %v618
  %v620 = vand.u32 %v619, 4294901760
  %621 = vmatpush1.msra.mxu0 %v620
  %622 = vmatprep.subr.mxu0 0.0
  %v623 = vand.u32 %v102, 4294901760
  %v624 = vsub.f32 %v102, %v623
  %v625 = vand.u32 %v624, 4294901760
  %626 = vmatpush1.msra.mxu0 %v625
  %627 = vmatprep.subr.mxu0 0.0
  %v628 = vand.u32 %v101, 4294901760
  %v629 = vsub.f32 %v101, %v628
  %v630 = vand.u32 %v629, 4294901760
  %631 = vmatpush1.msra.mxu0 %v630
  %632 = vmatprep.subr.mxu0 0.0
  %v633 = vand.u32 %v100, 4294901760
  %v634 = vsub.f32 %v100, %v633
  %v635 = vand.u32 %v634, 4294901760
  %636 = vmatpush1.msra.mxu0 %v635
  %637 = vmatprep.subr.mxu0 0.0
  %v638 = vand.u32 %v99, 4294901760
  %v639 = vsub.f32 %v99, %v638
  %v640 = vand.u32 %v639, 4294901760
  %641 = vmatpush1.msra.mxu0 %v640
  %642 = vmatprep.subr.mxu0 0.0
  %v643 = vand.u32 %v98, 4294901760
  %v644 = vsub.f32 %v98, %v643
  %v645 = vand.u32 %v644, 4294901760
  %646 = vmatpush1.msra.mxu0 %v645
  %647 = vmatprep.subr.mxu0 0.0
  %v648 = vand.u32 %v97, 4294901760
  %v649 = vsub.f32 %v97, %v648
  %v650 = vand.u32 %v649, 4294901760
  %651 = vmatpush1.msra.mxu0 %v650
  %652 = vmatprep.subr.mxu0 0.0
  %v653 = vand.u32 %v96, 4294901760
  %v654 = vsub.f32 %v96, %v653
  %v655 = vand.u32 %v654, 4294901760
  %656 = vmatpush1.msra.mxu0 %v655
  %657 = vmatprep.subr.mxu0 0.0
  %v658 = vand.u32 %v95, 4294901760
  %v659 = vsub.f32 %v95, %v658
  %v660 = vand.u32 %v659, 4294901760
  %661 = vmatpush1.msra.mxu0 %v660
  %662 = vmatprep.subr.mxu0 0.0
  %v663 = vand.u32 %v94, 4294901760
  %v664 = vsub.f32 %v94, %v663
  %v665 = vand.u32 %v664, 4294901760
  %666 = vmatpush1.msra.mxu0 %v665
  %667 = vmatprep.subr.mxu0 0.0
  %v668 = vand.u32 %v93, 4294901760
  %v669 = vsub.f32 %v93, %v668
  %v670 = vand.u32 %v669, 4294901760
  %671 = vmatpush1.msra.mxu0 %v670
  %672 = vmatprep.subr.mxu0 0.0
  %v673 = vand.u32 %v92, 4294901760
  %v674 = vsub.f32 %v92, %v673
  %v675 = vand.u32 %v674, 4294901760
  %676 = vmatpush1.msra.mxu0 %v675
  %677 = vmatprep.subr.mxu0 0.0
  %678 = vmatpush2.msra.mxu0 0.0
  %679 = vmatprep.subr.mxu0 0.0
  %680 = vmatpush2.msra.mxu0 0.0
  %681 = vmatprep.subr.mxu0 0.0
  %682 = vmatpush2.msra.mxu0 0.0
  %683 = vmatprep.subr.mxu0 0.0
  %684 = vmatpush2.msra.mxu0 0.0
  %685 = vmatprep.subr.mxu0 0.0
  %686 = vmatpush2.msra.mxu0 0.0
  %687 = vmatprep.subr.mxu0 0.0
  %688 = vmatpush2.msra.mxu0 0.0
  %689 = vmatprep.subr.mxu0 0.0
  %690 = vmatpush2.msra.mxu0 0.0
  %691 = vmatprep.subr.mxu0 0.0
  %692 = vmatpush2.msra.mxu0 0.0
  %693 = vmatprep.subr.mxu0 0.0
  %694 = vmatpush2.msra.mxu0 0.0
  %695 = vmatprep.subr.mxu0 0.0
  %696 = vmatpush2.msra.mxu0 0.0
  %697 = vmatprep.subr.mxu0 0.0
  %698 = vmatpush2.msra.mxu0 0.0
  %699 = vmatprep.subr.mxu0 0.0
  %700 = vmatpush2.msra.mxu0 0.0
  %701 = vmatprep.subr.mxu0 0.0
  %702 = vmatpush2.msra.mxu0 0.0
  %703 = vmatprep.subr.mxu0 0.0
  %704 = vmatpush2.msra.mxu0 0.0
  %705 = vmatprep.subr.mxu0 0.0
  %706 = vmatpush2.msra.mxu0 0.0
  %707 = vmatprep.subr.mxu0 0.0
  %708 = vmatpush2.msra.mxu0 0.0
  %709 = vmatprep.mubr.f32.mxu0 0.0
  %v710 = vand.u32 %v106, 4294901760
  %711 = vmatmul.mubr.f32.gmra.mxu0 %v710
  %v712 = vpop.f32.mrf.mxu0
  %v713 = vadd.f32 %v582, %v712
  %v714 = vpop.f32.mrf.mxu0
  %715 = vmatprep.mubr.f32.mxu0 0.0
  %v716 = vand.u32 %v109, 4294901760
  %717 = vmatmul.mubr.f32.gmra.mxu0 %v716
  %v718 = vpop.f32.mrf.mxu0
  %v719 = vadd.f32 %v590, %v718
  %v720 = vpop.f32.mrf.mxu0
  %721 = vmatprep.mubr.f32.mxu0 0.0
  %v722 = vand.u32 %v112, 4294901760
  %723 = vmatmul.mubr.f32.gmra.mxu0 %v722
  %v724 = vpop.f32.mrf.mxu0
  %v725 = vadd.f32 %v598, %v724
  %v726 = vpop.f32.mrf.mxu0
  %727 = vmatprep.mubr.f32.mxu0 0.0
  %v728 = vand.u32 %v115, 4294901760
  %729 = vmatmul.mubr.f32.gmra.mxu0 %v728
  %v730 = vpop.f32.mrf.mxu0
  %v731 = vadd.f32 %v606, %v730
  %v732 = vpop.f32.mrf.mxu0
  %733 = vdwg.mxu0
  %734 = vmatprep.subr.mxu0 0.0
  %735 = vmatpush1.msra.mxu0 0.0
  %736 = vmatprep.subr.mxu0 0.0
  %737 = vmatpush1.msra.mxu0 0.0
  %738 = vmatprep.subr.mxu0 0.0
  %739 = vmatpush1.msra.mxu0 0.0
  %740 = vmatprep.subr.mxu0 0.0
  %741 = vmatpush1.msra.mxu0 0.0
  %742 = vmatprep.subr.mxu0 0.0
  %v743 = vand.u32 %v103, 4294901760
  %744 = vmatpush1.msra.mxu0 %v743
  %745 = vmatprep.subr.mxu0 0.0
  %v746 = vand.u32 %v102, 4294901760
  %747 = vmatpush1.msra.mxu0 %v746
  %748 = vmatprep.subr.mxu0 0.0
  %v749 = vand.u32 %v101, 4294901760
  %750 = vmatpush1.msra.mxu0 %v749
  %751 = vmatprep.subr.mxu0 0.0
  %v752 = vand.u32 %v100, 4294901760
  %753 = vmatpush1.msra.mxu0 %v752
  %754 = vmatprep.subr.mxu0 0.0
  %v755 = vand.u32 %v99, 4294901760
  %756 = vmatpush1.msra.mxu0 %v755
  %757 = vmatprep.subr.mxu0 0.0
  %v758 = vand.u32 %v98, 4294901760
  %759 = vmatpush1.msra.mxu0 %v758
  %760 = vmatprep.subr.mxu0 0.0
  %v761 = vand.u32 %v97, 4294901760
  %762 = vmatpush1.msra.mxu0 %v761
  %763 = vmatprep.subr.mxu0 0.0
  %v764 = vand.u32 %v96, 4294901760
  %765 = vmatpush1.msra.mxu0 %v764
  %766 = vmatprep.subr.mxu0 0.0
  %v767 = vand.u32 %v95, 4294901760
  %768 = vmatpush1.msra.mxu0 %v767
  %769 = vmatprep.subr.mxu0 0.0
  %v770 = vand.u32 %v94, 4294901760
  %771 = vmatpush1.msra.mxu0 %v770
  %772 = vmatprep.subr.mxu0 0.0
  %v773 = vand.u32 %v93, 4294901760
  %774 = vmatpush1.msra.mxu0 %v773
  %775 = vmatprep.subr.mxu0 0.0
  %v776 = vand.u32 %v92, 4294901760
  %777 = vmatpush1.msra.mxu0 %v776
  %778 = vmatprep.subr.mxu0 0.0
  %779 = vmatpush2.msra.mxu0 0.0
  %780 = vmatprep.subr.mxu0 0.0
  %781 = vmatpush2.msra.mxu0 0.0
  %782 = vmatprep.subr.mxu0 0.0
  %783 = vmatpush2.msra.mxu0 0.0
  %784 = vmatprep.subr.mxu0 0.0
  %785 = vmatpush2.msra.mxu0 0.0
  %786 = vmatprep.subr.mxu0 0.0
  %787 = vmatpush2.msra.mxu0 0.0
  %788 = vmatprep.subr.mxu0 0.0
  %789 = vmatpush2.msra.mxu0 0.0
  %790 = vmatprep.subr.mxu0 0.0
  %791 = vmatpush2.msra.mxu0 0.0
  %792 = vmatprep.subr.mxu0 0.0
  %793 = vmatpush2.msra.mxu0 0.0
  %794 = vmatprep.subr.mxu0 0.0
  %795 = vmatpush2.msra.mxu0 0.0
  %796 = vmatprep.subr.mxu0 0.0
  %797 = vmatpush2.msra.mxu0 0.0
  %798 = vmatprep.subr.mxu0 0.0
  %799 = vmatpush2.msra.mxu0 0.0
  %800 = vmatprep.subr.mxu0 0.0
  %801 = vmatpush2.msra.mxu0 0.0
  %802 = vmatprep.subr.mxu0 0.0
  %803 = vmatpush2.msra.mxu0 0.0
  %804 = vmatprep.subr.mxu0 0.0
  %805 = vmatpush2.msra.mxu0 0.0
  %806 = vmatprep.subr.mxu0 0.0
  %807 = vmatpush2.msra.mxu0 0.0
  %808 = vmatprep.subr.mxu0 0.0
  %809 = vmatpush2.msra.mxu0 0.0
  %810 = vmatprep.mubr.f32.mxu0 0.0
  %v811 = vand.u32 %v106, 4294901760
  %812 = vmatmul.mubr.f32.gmra.mxu0 %v811
  %v813 = vpop.f32.mrf.mxu0
  %v814 = vadd.f32 %v713, %v813
  %v815 = vpop.f32.mrf.mxu0
  %816 = vmatprep.mubr.f32.mxu0 0.0
  %v817 = vand.u32 %v109, 4294901760
  %818 = vmatmul.mubr.f32.gmra.mxu0 %v817
  %v819 = vpop.f32.mrf.mxu0
  %v820 = vadd.f32 %v719, %v819
  %v821 = vpop.f32.mrf.mxu0
  %822 = vmatprep.mubr.f32.mxu0 0.0
  %v823 = vand.u32 %v112, 4294901760
  %824 = vmatmul.mubr.f32.gmra.mxu0 %v823
  %v825 = vpop.f32.mrf.mxu0
  %v826 = vadd.f32 %v725, %v825
  %v827 = vpop.f32.mrf.mxu0
  %828 = vmatprep.mubr.f32.mxu0 0.0
  %v829 = vand.u32 %v115, 4294901760
  %830 = vmatmul.mubr.f32.gmra.mxu0 %v829
  %v831 = vpop.f32.mrf.mxu0
  %v832 = vadd.f32 %v731, %v831
  %v833 = vpop.f32.mrf.mxu0
  %834 = vdwg.mxu0
  %v835 = vmax.f32 %v814, 0.0
  %v836 = vmax.f32 %v820, 0.0
  %v837 = vmax.f32 %v826, 0.0
  %v838 = vmax.f32 %v832, 0.0
  %v839 = vadd.f32 %v835, %v19
  %v840 = vadd.f32 %v836, %v20
  %v841 = vadd.f32 %v837, %v21
  %v842 = vadd.f32 %v838, %v22
  %v843 = vlaneseq
  %v844 = vshrl.u32 %v843, 7
  %v845 = vsub.s32 1, %v844
  %v846 = vrot.slane %v14, %v845
  %vm847 = vcmp.eq.s32.totalorder %v24, %v846
  %vm848 = vcmp.eq.s32.totalorder %v25, %v846
  %vm849 = vcmp.eq.s32.totalorder %v26, %v846
  %vm850 = vcmp.eq.s32.totalorder %v27, %v846
  %vm851 = vcmp.eq.s32.totalorder %v28, %v846
  %vm852 = vcmp.eq.s32.totalorder %v29, %v846
  %vm853 = vcmp.eq.s32.totalorder %v30, %v846
  %vm854 = vcmp.eq.s32.totalorder %v31, %v846
  %vm855 = vcmp.eq.s32.totalorder %v32, %v846
  %vm856 = vcmp.eq.s32.totalorder %v33, %v846
  %vm857 = vcmp.eq.s32.totalorder %v34, %v846
  %vm858 = vcmp.eq.s32.totalorder %v35, %v846
  %v859 = vlaneseq
  %v860 = vshrl.u32 %v859, 7
  %v861 = vsub.s32 3, %v860
  %v862 = vrot.slane %v14, %v861
  %vm863 = vcmp.eq.s32.totalorder %v24, %v862
  %vm864 = vcmp.eq.s32.totalorder %v25, %v862
  %vm865 = vcmp.eq.s32.totalorder %v26, %v862
  %vm866 = vcmp.eq.s32.totalorder %v27, %v862
  %vm867 = vcmp.eq.s32.totalorder %v28, %v862
  %vm868 = vcmp.eq.s32.totalorder %v29, %v862
  %vm869 = vcmp.eq.s32.totalorder %v30, %v862
  %vm870 = vcmp.eq.s32.totalorder %v31, %v862
  %vm871 = vcmp.eq.s32.totalorder %v32, %v862
  %vm872 = vcmp.eq.s32.totalorder %v33, %v862
  %vm873 = vcmp.eq.s32.totalorder %v34, %v862
  %vm874 = vcmp.eq.s32.totalorder %v35, %v862
  %vm875 = vmor %vm847, %vm863
  %vm876 = vmor %vm848, %vm864
  %vm877 = vmor %vm849, %vm865
  %vm878 = vmor %vm850, %vm866
  %vm879 = vmor %vm851, %vm867
  %vm880 = vmor %vm852, %vm868
  %vm881 = vmor %vm853, %vm869
  %vm882 = vmor %vm854, %vm870
  %vm883 = vmor %vm855, %vm871
  %vm884 = vmor %vm856, %vm872
  %vm885 = vmor %vm857, %vm873
  %vm886 = vmor %vm858, %vm874
  %v887 = vsel %vm875, 1, 0
  %v888 = vsel %vm876, 1, 0
  %v889 = vsel %vm877, 1, 0
  %v890 = vsel %vm878, 1, 0
  %v891 = vsel %vm879, 1, 0
  %v892 = vsel %vm880, 1, 0
  %v893 = vsel %vm881, 1, 0
  %v894 = vsel %vm882, 1, 0
  %v895 = vsel %vm883, 1, 0
  %v896 = vsel %vm884, 1, 0
  %v897 = vsel %vm885, 1, 0
  %v898 = vsel %vm886, 1, 0
  %v899 = vcvt.s32.f32 %v887
  %v900 = vcvt.s32.f32 %v888
  %v901 = vcvt.s32.f32 %v889
  %v902 = vcvt.s32.f32 %v890
  %v903 = vcvt.s32.f32 %v891
  %v904 = vcvt.s32.f32 %v892
  %v905 = vcvt.s32.f32 %v893
  %v906 = vcvt.s32.f32 %v894
  %v907 = vcvt.s32.f32 %v895
  %v908 = vcvt.s32.f32 %v896
  %v909 = vcvt.s32.f32 %v897
  %v910 = vcvt.s32.f32 %v898
  %911 = vmatprep.subr.mxu0 0.0
  %912 = vmatpush1.msra.mxu0 0.0
  %913 = vmatprep.subr.mxu0 0.0
  %914 = vmatpush1.msra.mxu0 0.0
  %915 = vmatprep.subr.mxu0 0.0
  %916 = vmatpush1.msra.mxu0 0.0
  %917 = vmatprep.subr.mxu0 0.0
  %918 = vmatpush1.msra.mxu0 0.0
  %919 = vmatprep.subr.mxu0 0.0
  %v920 = vand.u32 %v910, 4294901760
  %921 = vmatpush1.msra.mxu0 %v920
  %922 = vmatprep.subr.mxu0 0.0
  %v923 = vand.u32 %v909, 4294901760
  %924 = vmatpush1.msra.mxu0 %v923
  %925 = vmatprep.subr.mxu0 0.0
  %v926 = vand.u32 %v908, 4294901760
  %927 = vmatpush1.msra.mxu0 %v926
  %928 = vmatprep.subr.mxu0 0.0
  %v929 = vand.u32 %v907, 4294901760
  %930 = vmatpush1.msra.mxu0 %v929
  %931 = vmatprep.subr.mxu0 0.0
  %v932 = vand.u32 %v906, 4294901760
  %933 = vmatpush1.msra.mxu0 %v932
  %934 = vmatprep.subr.mxu0 0.0
  %v935 = vand.u32 %v905, 4294901760
  %936 = vmatpush1.msra.mxu0 %v935
  %937 = vmatprep.subr.mxu0 0.0
  %v938 = vand.u32 %v904, 4294901760
  %939 = vmatpush1.msra.mxu0 %v938
  %940 = vmatprep.subr.mxu0 0.0
  %v941 = vand.u32 %v903, 4294901760
  %942 = vmatpush1.msra.mxu0 %v941
  %943 = vmatprep.subr.mxu0 0.0
  %v944 = vand.u32 %v902, 4294901760
  %945 = vmatpush1.msra.mxu0 %v944
  %946 = vmatprep.subr.mxu0 0.0
  %v947 = vand.u32 %v901, 4294901760
  %948 = vmatpush1.msra.mxu0 %v947
  %949 = vmatprep.subr.mxu0 0.0
  %v950 = vand.u32 %v900, 4294901760
  %951 = vmatpush1.msra.mxu0 %v950
  %952 = vmatprep.subr.mxu0 0.0
  %v953 = vand.u32 %v899, 4294901760
  %954 = vmatpush1.msra.mxu0 %v953
  %955 = vmatprep.subr.mxu0 0.0
  %956 = vmatpush2.msra.mxu0 0.0
  %957 = vmatprep.subr.mxu0 0.0
  %958 = vmatpush2.msra.mxu0 0.0
  %959 = vmatprep.subr.mxu0 0.0
  %960 = vmatpush2.msra.mxu0 0.0
  %961 = vmatprep.subr.mxu0 0.0
  %962 = vmatpush2.msra.mxu0 0.0
  %963 = vmatprep.subr.mxu0 0.0
  %964 = vmatpush2.msra.mxu0 0.0
  %965 = vmatprep.subr.mxu0 0.0
  %966 = vmatpush2.msra.mxu0 0.0
  %967 = vmatprep.subr.mxu0 0.0
  %968 = vmatpush2.msra.mxu0 0.0
  %969 = vmatprep.subr.mxu0 0.0
  %970 = vmatpush2.msra.mxu0 0.0
  %971 = vmatprep.subr.mxu0 0.0
  %972 = vmatpush2.msra.mxu0 0.0
  %973 = vmatprep.subr.mxu0 0.0
  %974 = vmatpush2.msra.mxu0 0.0
  %975 = vmatprep.subr.mxu0 0.0
  %976 = vmatpush2.msra.mxu0 0.0
  %977 = vmatprep.subr.mxu0 0.0
  %978 = vmatpush2.msra.mxu0 0.0
  %979 = vmatprep.subr.mxu0 0.0
  %980 = vmatpush2.msra.mxu0 0.0
  %981 = vmatprep.subr.mxu0 0.0
  %982 = vmatpush2.msra.mxu0 0.0
  %983 = vmatprep.subr.mxu0 0.0
  %984 = vmatpush2.msra.mxu0 0.0
  %985 = vmatprep.subr.mxu0 0.0
  %986 = vmatpush2.msra.mxu0 0.0
  %987 = vmatprep.mubr.f32.mxu0 0.0
  %v988 = vand.u32 %v106, 4294901760
  %v989 = vsub.f32 %v106, %v988
  %v990 = vand.u32 %v989, 4294901760
  %v991 = vsub.f32 %v989, %v990
  %v992 = vand.u32 %v991, 4294901760
  %993 = vmatmul.mubr.f32.gmra.mxu0 %v992
  %v994 = vpop.f32.mrf.mxu0
  %v995 = vadd.f32 0.0, %v994
  %v996 = vpop.f32.mrf.mxu0
  %997 = vmatprep.mubr.f32.mxu0 0.0
  %v998 = vand.u32 %v109, 4294901760
  %v999 = vsub.f32 %v109, %v998
  %v1000 = vand.u32 %v999, 4294901760
  %v1001 = vsub.f32 %v999, %v1000
  %v1002 = vand.u32 %v1001, 4294901760
  %1003 = vmatmul.mubr.f32.gmra.mxu0 %v1002
  %v1004 = vpop.f32.mrf.mxu0
  %v1005 = vadd.f32 0.0, %v1004
  %v1006 = vpop.f32.mrf.mxu0
  %1007 = vmatprep.mubr.f32.mxu0 0.0
  %v1008 = vand.u32 %v112, 4294901760
  %v1009 = vsub.f32 %v112, %v1008
  %v1010 = vand.u32 %v1009, 4294901760
  %v1011 = vsub.f32 %v1009, %v1010
  %v1012 = vand.u32 %v1011, 4294901760
  %1013 = vmatmul.mubr.f32.gmra.mxu0 %v1012
  %v1014 = vpop.f32.mrf.mxu0
  %v1015 = vadd.f32 0.0, %v1014
  %v1016 = vpop.f32.mrf.mxu0
  %1017 = vmatprep.mubr.f32.mxu0 0.0
  %v1018 = vand.u32 %v115, 4294901760
  %v1019 = vsub.f32 %v115, %v1018
  %v1020 = vand.u32 %v1019, 4294901760
  %v1021 = vsub.f32 %v1019, %v1020
  %v1022 = vand.u32 %v1021, 4294901760
  %1023 = vmatmul.mubr.f32.gmra.mxu0 %v1022
  %v1024 = vpop.f32.mrf.mxu0
  %v1025 = vadd.f32 0.0, %v1024
  %v1026 = vpop.f32.mrf.mxu0
  %1027 = vdwg.mxu0
  %1028 = vmatprep.subr.mxu0 0.0
  %1029 = vmatpush1.msra.mxu0 0.0
  %1030 = vmatprep.subr.mxu0 0.0
  %1031 = vmatpush1.msra.mxu0 0.0
  %1032 = vmatprep.subr.mxu0 0.0
  %1033 = vmatpush1.msra.mxu0 0.0
  %1034 = vmatprep.subr.mxu0 0.0
  %1035 = vmatpush1.msra.mxu0 0.0
  %1036 = vmatprep.subr.mxu0 0.0
  %v1037 = vand.u32 %v910, 4294901760
  %v1038 = vsub.f32 %v910, %v1037
  %v1039 = vand.u32 %v1038, 4294901760
  %v1040 = vsub.f32 %v1038, %v1039
  %v1041 = vand.u32 %v1040, 4294901760
  %1042 = vmatpush1.msra.mxu0 %v1041
  %1043 = vmatprep.subr.mxu0 0.0
  %v1044 = vand.u32 %v909, 4294901760
  %v1045 = vsub.f32 %v909, %v1044
  %v1046 = vand.u32 %v1045, 4294901760
  %v1047 = vsub.f32 %v1045, %v1046
  %v1048 = vand.u32 %v1047, 4294901760
  %1049 = vmatpush1.msra.mxu0 %v1048
  %1050 = vmatprep.subr.mxu0 0.0
  %v1051 = vand.u32 %v908, 4294901760
  %v1052 = vsub.f32 %v908, %v1051
  %v1053 = vand.u32 %v1052, 4294901760
  %v1054 = vsub.f32 %v1052, %v1053
  %v1055 = vand.u32 %v1054, 4294901760
  %1056 = vmatpush1.msra.mxu0 %v1055
  %1057 = vmatprep.subr.mxu0 0.0
  %v1058 = vand.u32 %v907, 4294901760
  %v1059 = vsub.f32 %v907, %v1058
  %v1060 = vand.u32 %v1059, 4294901760
  %v1061 = vsub.f32 %v1059, %v1060
  %v1062 = vand.u32 %v1061, 4294901760
  %1063 = vmatpush1.msra.mxu0 %v1062
  %1064 = vmatprep.subr.mxu0 0.0
  %v1065 = vand.u32 %v906, 4294901760
  %v1066 = vsub.f32 %v906, %v1065
  %v1067 = vand.u32 %v1066, 4294901760
  %v1068 = vsub.f32 %v1066, %v1067
  %v1069 = vand.u32 %v1068, 4294901760
  %1070 = vmatpush1.msra.mxu0 %v1069
  %1071 = vmatprep.subr.mxu0 0.0
  %v1072 = vand.u32 %v905, 4294901760
  %v1073 = vsub.f32 %v905, %v1072
  %v1074 = vand.u32 %v1073, 4294901760
  %v1075 = vsub.f32 %v1073, %v1074
  %v1076 = vand.u32 %v1075, 4294901760
  %1077 = vmatpush1.msra.mxu0 %v1076
  %1078 = vmatprep.subr.mxu0 0.0
  %v1079 = vand.u32 %v904, 4294901760
  %v1080 = vsub.f32 %v904, %v1079
  %v1081 = vand.u32 %v1080, 4294901760
  %v1082 = vsub.f32 %v1080, %v1081
  %v1083 = vand.u32 %v1082, 4294901760
  %1084 = vmatpush1.msra.mxu0 %v1083
  %1085 = vmatprep.subr.mxu0 0.0
  %v1086 = vand.u32 %v903, 4294901760
  %v1087 = vsub.f32 %v903, %v1086
  %v1088 = vand.u32 %v1087, 4294901760
  %v1089 = vsub.f32 %v1087, %v1088
  %v1090 = vand.u32 %v1089, 4294901760
  %1091 = vmatpush1.msra.mxu0 %v1090
  %1092 = vmatprep.subr.mxu0 0.0
  %v1093 = vand.u32 %v902, 4294901760
  %v1094 = vsub.f32 %v902, %v1093
  %v1095 = vand.u32 %v1094, 4294901760
  %v1096 = vsub.f32 %v1094, %v1095
  %v1097 = vand.u32 %v1096, 4294901760
  %1098 = vmatpush1.msra.mxu0 %v1097
  %1099 = vmatprep.subr.mxu0 0.0
  %v1100 = vand.u32 %v901, 4294901760
  %v1101 = vsub.f32 %v901, %v1100
  %v1102 = vand.u32 %v1101, 4294901760
  %v1103 = vsub.f32 %v1101, %v1102
  %v1104 = vand.u32 %v1103, 4294901760
  %1105 = vmatpush1.msra.mxu0 %v1104
  %1106 = vmatprep.subr.mxu0 0.0
  %v1107 = vand.u32 %v900, 4294901760
  %v1108 = vsub.f32 %v900, %v1107
  %v1109 = vand.u32 %v1108, 4294901760
  %v1110 = vsub.f32 %v1108, %v1109
  %v1111 = vand.u32 %v1110, 4294901760
  %1112 = vmatpush1.msra.mxu0 %v1111
  %1113 = vmatprep.subr.mxu0 0.0
  %v1114 = vand.u32 %v899, 4294901760
  %v1115 = vsub.f32 %v899, %v1114
  %v1116 = vand.u32 %v1115, 4294901760
  %v1117 = vsub.f32 %v1115, %v1116
  %v1118 = vand.u32 %v1117, 4294901760
  %1119 = vmatpush1.msra.mxu0 %v1118
  %1120 = vmatprep.subr.mxu0 0.0
  %1121 = vmatpush2.msra.mxu0 0.0
  %1122 = vmatprep.subr.mxu0 0.0
  %1123 = vmatpush2.msra.mxu0 0.0
  %1124 = vmatprep.subr.mxu0 0.0
  %1125 = vmatpush2.msra.mxu0 0.0
  %1126 = vmatprep.subr.mxu0 0.0
  %1127 = vmatpush2.msra.mxu0 0.0
  %1128 = vmatprep.subr.mxu0 0.0
  %1129 = vmatpush2.msra.mxu0 0.0
  %1130 = vmatprep.subr.mxu0 0.0
  %1131 = vmatpush2.msra.mxu0 0.0
  %1132 = vmatprep.subr.mxu0 0.0
  %1133 = vmatpush2.msra.mxu0 0.0
  %1134 = vmatprep.subr.mxu0 0.0
  %1135 = vmatpush2.msra.mxu0 0.0
  %1136 = vmatprep.subr.mxu0 0.0
  %1137 = vmatpush2.msra.mxu0 0.0
  %1138 = vmatprep.subr.mxu0 0.0
  %1139 = vmatpush2.msra.mxu0 0.0
  %1140 = vmatprep.subr.mxu0 0.0
  %1141 = vmatpush2.msra.mxu0 0.0
  %1142 = vmatprep.subr.mxu0 0.0
  %1143 = vmatpush2.msra.mxu0 0.0
  %1144 = vmatprep.subr.mxu0 0.0
  %1145 = vmatpush2.msra.mxu0 0.0
  %1146 = vmatprep.subr.mxu0 0.0
  %1147 = vmatpush2.msra.mxu0 0.0
  %1148 = vmatprep.subr.mxu0 0.0
  %1149 = vmatpush2.msra.mxu0 0.0
  %1150 = vmatprep.subr.mxu0 0.0
  %1151 = vmatpush2.msra.mxu0 0.0
  %1152 = vmatprep.mubr.f32.mxu0 0.0
  %v1153 = vand.u32 %v106, 4294901760
  %1154 = vmatmul.mubr.f32.gmra.mxu0 %v1153
  %v1155 = vpop.f32.mrf.mxu0
  %v1156 = vadd.f32 %v995, %v1155
  %v1157 = vpop.f32.mrf.mxu0
  %1158 = vmatprep.mubr.f32.mxu0 0.0
  %v1159 = vand.u32 %v109, 4294901760
  %1160 = vmatmul.mubr.f32.gmra.mxu0 %v1159
  %v1161 = vpop.f32.mrf.mxu0
  %v1162 = vadd.f32 %v1005, %v1161
  %v1163 = vpop.f32.mrf.mxu0
  %1164 = vmatprep.mubr.f32.mxu0 0.0
  %v1165 = vand.u32 %v112, 4294901760
  %1166 = vmatmul.mubr.f32.gmra.mxu0 %v1165
  %v1167 = vpop.f32.mrf.mxu0
  %v1168 = vadd.f32 %v1015, %v1167
  %v1169 = vpop.f32.mrf.mxu0
  %1170 = vmatprep.mubr.f32.mxu0 0.0
  %v1171 = vand.u32 %v115, 4294901760
  %1172 = vmatmul.mubr.f32.gmra.mxu0 %v1171
  %v1173 = vpop.f32.mrf.mxu0
  %v1174 = vadd.f32 %v1025, %v1173
  %v1175 = vpop.f32.mrf.mxu0
  %1176 = vdwg.mxu0
  %1177 = vmatprep.subr.mxu0 0.0
  %1178 = vmatpush1.msra.mxu0 0.0
  %1179 = vmatprep.subr.mxu0 0.0
  %1180 = vmatpush1.msra.mxu0 0.0
  %1181 = vmatprep.subr.mxu0 0.0
  %1182 = vmatpush1.msra.mxu0 0.0
  %1183 = vmatprep.subr.mxu0 0.0
  %1184 = vmatpush1.msra.mxu0 0.0
  %1185 = vmatprep.subr.mxu0 0.0
  %v1186 = vand.u32 %v910, 4294901760
  %v1187 = vsub.f32 %v910, %v1186
  %1188 = vmatpush1.msra.mxu0 %v1187
  %1189 = vmatprep.subr.mxu0 0.0
  %v1190 = vand.u32 %v909, 4294901760
  %v1191 = vsub.f32 %v909, %v1190
  %1192 = vmatpush1.msra.mxu0 %v1191
  %1193 = vmatprep.subr.mxu0 0.0
  %v1194 = vand.u32 %v908, 4294901760
  %v1195 = vsub.f32 %v908, %v1194
  %1196 = vmatpush1.msra.mxu0 %v1195
  %1197 = vmatprep.subr.mxu0 0.0
  %v1198 = vand.u32 %v907, 4294901760
  %v1199 = vsub.f32 %v907, %v1198
  %1200 = vmatpush1.msra.mxu0 %v1199
  %1201 = vmatprep.subr.mxu0 0.0
  %v1202 = vand.u32 %v906, 4294901760
  %v1203 = vsub.f32 %v906, %v1202
  %1204 = vmatpush1.msra.mxu0 %v1203
  %1205 = vmatprep.subr.mxu0 0.0
  %v1206 = vand.u32 %v905, 4294901760
  %v1207 = vsub.f32 %v905, %v1206
  %1208 = vmatpush1.msra.mxu0 %v1207
  %1209 = vmatprep.subr.mxu0 0.0
  %v1210 = vand.u32 %v904, 4294901760
  %v1211 = vsub.f32 %v904, %v1210
  %1212 = vmatpush1.msra.mxu0 %v1211
  %1213 = vmatprep.subr.mxu0 0.0
  %v1214 = vand.u32 %v903, 4294901760
  %v1215 = vsub.f32 %v903, %v1214
  %1216 = vmatpush1.msra.mxu0 %v1215
  %1217 = vmatprep.subr.mxu0 0.0
  %v1218 = vand.u32 %v902, 4294901760
  %v1219 = vsub.f32 %v902, %v1218
  %1220 = vmatpush1.msra.mxu0 %v1219
  %1221 = vmatprep.subr.mxu0 0.0
  %v1222 = vand.u32 %v901, 4294901760
  %v1223 = vsub.f32 %v901, %v1222
  %1224 = vmatpush1.msra.mxu0 %v1223
  %1225 = vmatprep.subr.mxu0 0.0
  %v1226 = vand.u32 %v900, 4294901760
  %v1227 = vsub.f32 %v900, %v1226
  %1228 = vmatpush1.msra.mxu0 %v1227
  %1229 = vmatprep.subr.mxu0 0.0
  %v1230 = vand.u32 %v899, 4294901760
  %v1231 = vsub.f32 %v899, %v1230
  %1232 = vmatpush1.msra.mxu0 %v1231
  %1233 = vmatprep.subr.mxu0 0.0
  %1234 = vmatpush2.msra.mxu0 0.0
  %1235 = vmatprep.subr.mxu0 0.0
  %1236 = vmatpush2.msra.mxu0 0.0
  %1237 = vmatprep.subr.mxu0 0.0
  %1238 = vmatpush2.msra.mxu0 0.0
  %1239 = vmatprep.subr.mxu0 0.0
  %1240 = vmatpush2.msra.mxu0 0.0
  %1241 = vmatprep.subr.mxu0 0.0
  %1242 = vmatpush2.msra.mxu0 0.0
  %1243 = vmatprep.subr.mxu0 0.0
  %1244 = vmatpush2.msra.mxu0 0.0
  %1245 = vmatprep.subr.mxu0 0.0
  %1246 = vmatpush2.msra.mxu0 0.0
  %1247 = vmatprep.subr.mxu0 0.0
  %1248 = vmatpush2.msra.mxu0 0.0
  %1249 = vmatprep.subr.mxu0 0.0
  %1250 = vmatpush2.msra.mxu0 0.0
  %1251 = vmatprep.subr.mxu0 0.0
  %1252 = vmatpush2.msra.mxu0 0.0
  %1253 = vmatprep.subr.mxu0 0.0
  %1254 = vmatpush2.msra.mxu0 0.0
  %1255 = vmatprep.subr.mxu0 0.0
  %1256 = vmatpush2.msra.mxu0 0.0
  %1257 = vmatprep.subr.mxu0 0.0
  %1258 = vmatpush2.msra.mxu0 0.0
  %1259 = vmatprep.subr.mxu0 0.0
  %1260 = vmatpush2.msra.mxu0 0.0
  %1261 = vmatprep.subr.mxu0 0.0
  %1262 = vmatpush2.msra.mxu0 0.0
  %1263 = vmatprep.subr.mxu0 0.0
  %1264 = vmatpush2.msra.mxu0 0.0
  %1265 = vmatprep.mubr.f32.mxu0 0.0
  %v1266 = vand.u32 %v106, 4294901760
  %v1267 = vsub.f32 %v106, %v1266
  %1268 = vmatmul.mubr.f32.gmra.mxu0 %v1267
  %v1269 = vpop.f32.mrf.mxu0
  %v1270 = vadd.f32 %v1156, %v1269
  %v1271 = vpop.f32.mrf.mxu0
  %1272 = vmatprep.mubr.f32.mxu0 0.0
  %v1273 = vand.u32 %v109, 4294901760
  %v1274 = vsub.f32 %v109, %v1273
  %1275 = vmatmul.mubr.f32.gmra.mxu0 %v1274
  %v1276 = vpop.f32.mrf.mxu0
  %v1277 = vadd.f32 %v1162, %v1276
  %v1278 = vpop.f32.mrf.mxu0
  %1279 = vmatprep.mubr.f32.mxu0 0.0
  %v1280 = vand.u32 %v112, 4294901760
  %v1281 = vsub.f32 %v112, %v1280
  %1282 = vmatmul.mubr.f32.gmra.mxu0 %v1281
  %v1283 = vpop.f32.mrf.mxu0
  %v1284 = vadd.f32 %v1168, %v1283
  %v1285 = vpop.f32.mrf.mxu0
  %1286 = vmatprep.mubr.f32.mxu0 0.0
  %v1287 = vand.u32 %v115, 4294901760
  %v1288 = vsub.f32 %v115, %v1287
  %1289 = vmatmul.mubr.f32.gmra.mxu0 %v1288
  %v1290 = vpop.f32.mrf.mxu0
  %v1291 = vadd.f32 %v1174, %v1290
  %v1292 = vpop.f32.mrf.mxu0
  %1293 = vdwg.mxu0
  %1294 = vmatprep.subr.mxu0 0.0
  %1295 = vmatpush1.msra.mxu0 0.0
  %1296 = vmatprep.subr.mxu0 0.0
  %1297 = vmatpush1.msra.mxu0 0.0
  %1298 = vmatprep.subr.mxu0 0.0
  %1299 = vmatpush1.msra.mxu0 0.0
  %1300 = vmatprep.subr.mxu0 0.0
  %1301 = vmatpush1.msra.mxu0 0.0
  %1302 = vmatprep.subr.mxu0 0.0
  %v1303 = vand.u32 %v910, 4294901760
  %1304 = vmatpush1.msra.mxu0 %v1303
  %1305 = vmatprep.subr.mxu0 0.0
  %v1306 = vand.u32 %v909, 4294901760
  %1307 = vmatpush1.msra.mxu0 %v1306
  %1308 = vmatprep.subr.mxu0 0.0
  %v1309 = vand.u32 %v908, 4294901760
  %1310 = vmatpush1.msra.mxu0 %v1309
  %1311 = vmatprep.subr.mxu0 0.0
  %v1312 = vand.u32 %v907, 4294901760
  %1313 = vmatpush1.msra.mxu0 %v1312
  %1314 = vmatprep.subr.mxu0 0.0
  %v1315 = vand.u32 %v906, 4294901760
  %1316 = vmatpush1.msra.mxu0 %v1315
  %1317 = vmatprep.subr.mxu0 0.0
  %v1318 = vand.u32 %v905, 4294901760
  %1319 = vmatpush1.msra.mxu0 %v1318
  %1320 = vmatprep.subr.mxu0 0.0
  %v1321 = vand.u32 %v904, 4294901760
  %1322 = vmatpush1.msra.mxu0 %v1321
  %1323 = vmatprep.subr.mxu0 0.0
  %v1324 = vand.u32 %v903, 4294901760
  %1325 = vmatpush1.msra.mxu0 %v1324
  %1326 = vmatprep.subr.mxu0 0.0
  %v1327 = vand.u32 %v902, 4294901760
  %1328 = vmatpush1.msra.mxu0 %v1327
  %1329 = vmatprep.subr.mxu0 0.0
  %v1330 = vand.u32 %v901, 4294901760
  %1331 = vmatpush1.msra.mxu0 %v1330
  %1332 = vmatprep.subr.mxu0 0.0
  %v1333 = vand.u32 %v900, 4294901760
  %1334 = vmatpush1.msra.mxu0 %v1333
  %1335 = vmatprep.subr.mxu0 0.0
  %v1336 = vand.u32 %v899, 4294901760
  %1337 = vmatpush1.msra.mxu0 %v1336
  %1338 = vmatprep.subr.mxu0 0.0
  %1339 = vmatpush2.msra.mxu0 0.0
  %1340 = vmatprep.subr.mxu0 0.0
  %1341 = vmatpush2.msra.mxu0 0.0
  %1342 = vmatprep.subr.mxu0 0.0
  %1343 = vmatpush2.msra.mxu0 0.0
  %1344 = vmatprep.subr.mxu0 0.0
  %1345 = vmatpush2.msra.mxu0 0.0
  %1346 = vmatprep.subr.mxu0 0.0
  %1347 = vmatpush2.msra.mxu0 0.0
  %1348 = vmatprep.subr.mxu0 0.0
  %1349 = vmatpush2.msra.mxu0 0.0
  %1350 = vmatprep.subr.mxu0 0.0
  %1351 = vmatpush2.msra.mxu0 0.0
  %1352 = vmatprep.subr.mxu0 0.0
  %1353 = vmatpush2.msra.mxu0 0.0
  %1354 = vmatprep.subr.mxu0 0.0
  %1355 = vmatpush2.msra.mxu0 0.0
  %1356 = vmatprep.subr.mxu0 0.0
  %1357 = vmatpush2.msra.mxu0 0.0
  %1358 = vmatprep.subr.mxu0 0.0
  %1359 = vmatpush2.msra.mxu0 0.0
  %1360 = vmatprep.subr.mxu0 0.0
  %1361 = vmatpush2.msra.mxu0 0.0
  %1362 = vmatprep.subr.mxu0 0.0
  %1363 = vmatpush2.msra.mxu0 0.0
  %1364 = vmatprep.subr.mxu0 0.0
  %1365 = vmatpush2.msra.mxu0 0.0
  %1366 = vmatprep.subr.mxu0 0.0
  %1367 = vmatpush2.msra.mxu0 0.0
  %1368 = vmatprep.subr.mxu0 0.0
  %1369 = vmatpush2.msra.mxu0 0.0
  %1370 = vmatprep.mubr.f32.mxu0 0.0
  %v1371 = vand.u32 %v106, 4294901760
  %v1372 = vsub.f32 %v106, %v1371
  %v1373 = vand.u32 %v1372, 4294901760
  %1374 = vmatmul.mubr.f32.gmra.mxu0 %v1373
  %v1375 = vpop.f32.mrf.mxu0
  %v1376 = vadd.f32 %v1270, %v1375
  %v1377 = vpop.f32.mrf.mxu0
  %1378 = vmatprep.mubr.f32.mxu0 0.0
  %v1379 = vand.u32 %v109, 4294901760
  %v1380 = vsub.f32 %v109, %v1379
  %v1381 = vand.u32 %v1380, 4294901760
  %1382 = vmatmul.mubr.f32.gmra.mxu0 %v1381
  %v1383 = vpop.f32.mrf.mxu0
  %v1384 = vadd.f32 %v1277, %v1383
  %v1385 = vpop.f32.mrf.mxu0
  %1386 = vmatprep.mubr.f32.mxu0 0.0
  %v1387 = vand.u32 %v112, 4294901760
  %v1388 = vsub.f32 %v112, %v1387
  %v1389 = vand.u32 %v1388, 4294901760
  %1390 = vmatmul.mubr.f32.gmra.mxu0 %v1389
  %v1391 = vpop.f32.mrf.mxu0
  %v1392 = vadd.f32 %v1284, %v1391
  %v1393 = vpop.f32.mrf.mxu0
  %1394 = vmatprep.mubr.f32.mxu0 0.0
  %v1395 = vand.u32 %v115, 4294901760
  %v1396 = vsub.f32 %v115, %v1395
  %v1397 = vand.u32 %v1396, 4294901760
  %1398 = vmatmul.mubr.f32.gmra.mxu0 %v1397
  %v1399 = vpop.f32.mrf.mxu0
  %v1400 = vadd.f32 %v1291, %v1399
  %v1401 = vpop.f32.mrf.mxu0
  %1402 = vdwg.mxu0
  %1403 = vmatprep.subr.mxu0 0.0
  %1404 = vmatpush1.msra.mxu0 0.0
  %1405 = vmatprep.subr.mxu0 0.0
  %1406 = vmatpush1.msra.mxu0 0.0
  %1407 = vmatprep.subr.mxu0 0.0
  %1408 = vmatpush1.msra.mxu0 0.0
  %1409 = vmatprep.subr.mxu0 0.0
  %1410 = vmatpush1.msra.mxu0 0.0
  %1411 = vmatprep.subr.mxu0 0.0
  %v1412 = vand.u32 %v910, 4294901760
  %v1413 = vsub.f32 %v910, %v1412
  %v1414 = vand.u32 %v1413, 4294901760
  %1415 = vmatpush1.msra.mxu0 %v1414
  %1416 = vmatprep.subr.mxu0 0.0
  %v1417 = vand.u32 %v909, 4294901760
  %v1418 = vsub.f32 %v909, %v1417
  %v1419 = vand.u32 %v1418, 4294901760
  %1420 = vmatpush1.msra.mxu0 %v1419
  %1421 = vmatprep.subr.mxu0 0.0
  %v1422 = vand.u32 %v908, 4294901760
  %v1423 = vsub.f32 %v908, %v1422
  %v1424 = vand.u32 %v1423, 4294901760
  %1425 = vmatpush1.msra.mxu0 %v1424
  %1426 = vmatprep.subr.mxu0 0.0
  %v1427 = vand.u32 %v907, 4294901760
  %v1428 = vsub.f32 %v907, %v1427
  %v1429 = vand.u32 %v1428, 4294901760
  %1430 = vmatpush1.msra.mxu0 %v1429
  %1431 = vmatprep.subr.mxu0 0.0
  %v1432 = vand.u32 %v906, 4294901760
  %v1433 = vsub.f32 %v906, %v1432
  %v1434 = vand.u32 %v1433, 4294901760
  %1435 = vmatpush1.msra.mxu0 %v1434
  %1436 = vmatprep.subr.mxu0 0.0
  %v1437 = vand.u32 %v905, 4294901760
  %v1438 = vsub.f32 %v905, %v1437
  %v1439 = vand.u32 %v1438, 4294901760
  %1440 = vmatpush1.msra.mxu0 %v1439
  %1441 = vmatprep.subr.mxu0 0.0
  %v1442 = vand.u32 %v904, 4294901760
  %v1443 = vsub.f32 %v904, %v1442
  %v1444 = vand.u32 %v1443, 4294901760
  %1445 = vmatpush1.msra.mxu0 %v1444
  %1446 = vmatprep.subr.mxu0 0.0
  %v1447 = vand.u32 %v903, 4294901760
  %v1448 = vsub.f32 %v903, %v1447
  %v1449 = vand.u32 %v1448, 4294901760
  %1450 = vmatpush1.msra.mxu0 %v1449
  %1451 = vmatprep.subr.mxu0 0.0
  %v1452 = vand.u32 %v902, 4294901760
  %v1453 = vsub.f32 %v902, %v1452
  %v1454 = vand.u32 %v1453, 4294901760
  %1455 = vmatpush1.msra.mxu0 %v1454
  %1456 = vmatprep.subr.mxu0 0.0
  %v1457 = vand.u32 %v901, 4294901760
  %v1458 = vsub.f32 %v901, %v1457
  %v1459 = vand.u32 %v1458, 4294901760
  %1460 = vmatpush1.msra.mxu0 %v1459
  %1461 = vmatprep.subr.mxu0 0.0
  %v1462 = vand.u32 %v900, 4294901760
  %v1463 = vsub.f32 %v900, %v1462
  %v1464 = vand.u32 %v1463, 4294901760
  %1465 = vmatpush1.msra.mxu0 %v1464
  %1466 = vmatprep.subr.mxu0 0.0
  %v1467 = vand.u32 %v899, 4294901760
  %v1468 = vsub.f32 %v899, %v1467
  %v1469 = vand.u32 %v1468, 4294901760
  %1470 = vmatpush1.msra.mxu0 %v1469
  %1471 = vmatprep.subr.mxu0 0.0
  %1472 = vmatpush2.msra.mxu0 0.0
  %1473 = vmatprep.subr.mxu0 0.0
  %1474 = vmatpush2.msra.mxu0 0.0
  %1475 = vmatprep.subr.mxu0 0.0
  %1476 = vmatpush2.msra.mxu0 0.0
  %1477 = vmatprep.subr.mxu0 0.0
  %1478 = vmatpush2.msra.mxu0 0.0
  %1479 = vmatprep.subr.mxu0 0.0
  %1480 = vmatpush2.msra.mxu0 0.0
  %1481 = vmatprep.subr.mxu0 0.0
  %1482 = vmatpush2.msra.mxu0 0.0
  %1483 = vmatprep.subr.mxu0 0.0
  %1484 = vmatpush2.msra.mxu0 0.0
  %1485 = vmatprep.subr.mxu0 0.0
  %1486 = vmatpush2.msra.mxu0 0.0
  %1487 = vmatprep.subr.mxu0 0.0
  %1488 = vmatpush2.msra.mxu0 0.0
  %1489 = vmatprep.subr.mxu0 0.0
  %1490 = vmatpush2.msra.mxu0 0.0
  %1491 = vmatprep.subr.mxu0 0.0
  %1492 = vmatpush2.msra.mxu0 0.0
  %1493 = vmatprep.subr.mxu0 0.0
  %1494 = vmatpush2.msra.mxu0 0.0
  %1495 = vmatprep.subr.mxu0 0.0
  %1496 = vmatpush2.msra.mxu0 0.0
  %1497 = vmatprep.subr.mxu0 0.0
  %1498 = vmatpush2.msra.mxu0 0.0
  %1499 = vmatprep.subr.mxu0 0.0
  %1500 = vmatpush2.msra.mxu0 0.0
  %1501 = vmatprep.subr.mxu0 0.0
  %1502 = vmatpush2.msra.mxu0 0.0
  %1503 = vmatprep.mubr.f32.mxu0 0.0
  %v1504 = vand.u32 %v106, 4294901760
  %1505 = vmatmul.mubr.f32.gmra.mxu0 %v1504
  %v1506 = vpop.f32.mrf.mxu0
  %v1507 = vadd.f32 %v1376, %v1506
  %v1508 = vpop.f32.mrf.mxu0
  %1509 = vmatprep.mubr.f32.mxu0 0.0
  %v1510 = vand.u32 %v109, 4294901760
  %1511 = vmatmul.mubr.f32.gmra.mxu0 %v1510
  %v1512 = vpop.f32.mrf.mxu0
  %v1513 = vadd.f32 %v1384, %v1512
  %v1514 = vpop.f32.mrf.mxu0
  %1515 = vmatprep.mubr.f32.mxu0 0.0
  %v1516 = vand.u32 %v112, 4294901760
  %1517 = vmatmul.mubr.f32.gmra.mxu0 %v1516
  %v1518 = vpop.f32.mrf.mxu0
  %v1519 = vadd.f32 %v1392, %v1518
  %v1520 = vpop.f32.mrf.mxu0
  %1521 = vmatprep.mubr.f32.mxu0 0.0
  %v1522 = vand.u32 %v115, 4294901760
  %1523 = vmatmul.mubr.f32.gmra.mxu0 %v1522
  %v1524 = vpop.f32.mrf.mxu0
  %v1525 = vadd.f32 %v1400, %v1524
  %v1526 = vpop.f32.mrf.mxu0
  %1527 = vdwg.mxu0
  %1528 = vmatprep.subr.mxu0 0.0
  %1529 = vmatpush1.msra.mxu0 0.0
  %1530 = vmatprep.subr.mxu0 0.0
  %1531 = vmatpush1.msra.mxu0 0.0
  %1532 = vmatprep.subr.mxu0 0.0
  %1533 = vmatpush1.msra.mxu0 0.0
  %1534 = vmatprep.subr.mxu0 0.0
  %1535 = vmatpush1.msra.mxu0 0.0
  %1536 = vmatprep.subr.mxu0 0.0
  %v1537 = vand.u32 %v910, 4294901760
  %1538 = vmatpush1.msra.mxu0 %v1537
  %1539 = vmatprep.subr.mxu0 0.0
  %v1540 = vand.u32 %v909, 4294901760
  %1541 = vmatpush1.msra.mxu0 %v1540
  %1542 = vmatprep.subr.mxu0 0.0
  %v1543 = vand.u32 %v908, 4294901760
  %1544 = vmatpush1.msra.mxu0 %v1543
  %1545 = vmatprep.subr.mxu0 0.0
  %v1546 = vand.u32 %v907, 4294901760
  %1547 = vmatpush1.msra.mxu0 %v1546
  %1548 = vmatprep.subr.mxu0 0.0
  %v1549 = vand.u32 %v906, 4294901760
  %1550 = vmatpush1.msra.mxu0 %v1549
  %1551 = vmatprep.subr.mxu0 0.0
  %v1552 = vand.u32 %v905, 4294901760
  %1553 = vmatpush1.msra.mxu0 %v1552
  %1554 = vmatprep.subr.mxu0 0.0
  %v1555 = vand.u32 %v904, 4294901760
  %1556 = vmatpush1.msra.mxu0 %v1555
  %1557 = vmatprep.subr.mxu0 0.0
  %v1558 = vand.u32 %v903, 4294901760
  %1559 = vmatpush1.msra.mxu0 %v1558
  %1560 = vmatprep.subr.mxu0 0.0
  %v1561 = vand.u32 %v902, 4294901760
  %1562 = vmatpush1.msra.mxu0 %v1561
  %1563 = vmatprep.subr.mxu0 0.0
  %v1564 = vand.u32 %v901, 4294901760
  %1565 = vmatpush1.msra.mxu0 %v1564
  %1566 = vmatprep.subr.mxu0 0.0
  %v1567 = vand.u32 %v900, 4294901760
  %1568 = vmatpush1.msra.mxu0 %v1567
  %1569 = vmatprep.subr.mxu0 0.0
  %v1570 = vand.u32 %v899, 4294901760
  %1571 = vmatpush1.msra.mxu0 %v1570
  %1572 = vmatprep.subr.mxu0 0.0
  %1573 = vmatpush2.msra.mxu0 0.0
  %1574 = vmatprep.subr.mxu0 0.0
  %1575 = vmatpush2.msra.mxu0 0.0
  %1576 = vmatprep.subr.mxu0 0.0
  %1577 = vmatpush2.msra.mxu0 0.0
  %1578 = vmatprep.subr.mxu0 0.0
  %1579 = vmatpush2.msra.mxu0 0.0
  %1580 = vmatprep.subr.mxu0 0.0
  %1581 = vmatpush2.msra.mxu0 0.0
  %1582 = vmatprep.subr.mxu0 0.0
  %1583 = vmatpush2.msra.mxu0 0.0
  %1584 = vmatprep.subr.mxu0 0.0
  %1585 = vmatpush2.msra.mxu0 0.0
  %1586 = vmatprep.subr.mxu0 0.0
  %1587 = vmatpush2.msra.mxu0 0.0
  %1588 = vmatprep.subr.mxu0 0.0
  %1589 = vmatpush2.msra.mxu0 0.0
  %1590 = vmatprep.subr.mxu0 0.0
  %1591 = vmatpush2.msra.mxu0 0.0
  %1592 = vmatprep.subr.mxu0 0.0
  %1593 = vmatpush2.msra.mxu0 0.0
  %1594 = vmatprep.subr.mxu0 0.0
  %1595 = vmatpush2.msra.mxu0 0.0
  %1596 = vmatprep.subr.mxu0 0.0
  %1597 = vmatpush2.msra.mxu0 0.0
  %1598 = vmatprep.subr.mxu0 0.0
  %1599 = vmatpush2.msra.mxu0 0.0
  %1600 = vmatprep.subr.mxu0 0.0
  %1601 = vmatpush2.msra.mxu0 0.0
  %1602 = vmatprep.subr.mxu0 0.0
  %1603 = vmatpush2.msra.mxu0 0.0
  %1604 = vmatprep.mubr.f32.mxu0 0.0
  %v1605 = vand.u32 %v106, 4294901760
  %1606 = vmatmul.mubr.f32.gmra.mxu0 %v1605
  %v1607 = vpop.f32.mrf.mxu0
  %v1608 = vadd.f32 %v1507, %v1607
  %v1609 = vpop.f32.mrf.mxu0
  %1610 = vmatprep.mubr.f32.mxu0 0.0
  %v1611 = vand.u32 %v109, 4294901760
  %1612 = vmatmul.mubr.f32.gmra.mxu0 %v1611
  %v1613 = vpop.f32.mrf.mxu0
  %v1614 = vadd.f32 %v1513, %v1613
  %v1615 = vpop.f32.mrf.mxu0
  %1616 = vmatprep.mubr.f32.mxu0 0.0
  %v1617 = vand.u32 %v112, 4294901760
  %1618 = vmatmul.mubr.f32.gmra.mxu0 %v1617
  %v1619 = vpop.f32.mrf.mxu0
  %v1620 = vadd.f32 %v1519, %v1619
  %v1621 = vpop.f32.mrf.mxu0
  %1622 = vmatprep.mubr.f32.mxu0 0.0
  %v1623 = vand.u32 %v115, 4294901760
  %1624 = vmatmul.mubr.f32.gmra.mxu0 %v1623
  %v1625 = vpop.f32.mrf.mxu0
  %v1626 = vadd.f32 %v1525, %v1625
  %v1627 = vpop.f32.mrf.mxu0
  %1628 = vdwg.mxu0
  %v1629 = vmax.f32 %v1608, 0.0
  %v1630 = vmax.f32 %v1614, 0.0
  %v1631 = vmax.f32 %v1620, 0.0
  %v1632 = vmax.f32 %v1626, 0.0
  %v1633 = vadd.f32 %v1629, %v19
  %v1634 = vadd.f32 %v1630, %v20
  %v1635 = vadd.f32 %v1631, %v21
  %v1636 = vadd.f32 %v1632, %v22
  %vm1637 = vcmask 64512
  %1638 = vst.msk [vmem:[%s3] sm:$0xff] %vm1637, %v839
  %1639 = vst.msk [vmem:[%s3 + $0x8] sm:$0xff] %vm1637, %v840
  %1640 = vst.msk [vmem:[%s3 + $0x10] sm:$0xff] %vm1637, %v841
  %1641 = vst.msk [vmem:[%s3 + $0x18] sm:$0xff] %vm1637, %v842
  %1642 = vst.msk [vmem:[%s3 + $0x20] sm:$0xff] %vm1637, %v1633
  %1643 = vst.msk [vmem:[%s3 + $0x28] sm:$0xff] %vm1637, %v1634
  %1644 = vst.msk [vmem:[%s3 + $0x30] sm:$0xff] %vm1637, %v1635
  %1645 = vst.msk [vmem:[%s3 + $0x38] sm:$0xff] %vm1637, %v1636
  // Predicated region
  $region14: #{embeddings_forward.1} parent=0 // pred_check
    _
  $region15: #{embeddings_forward.1} parent=0 // pred_check_branch
    %1647 = sbr.rel (0) target = $region17
  $region16: #{embeddings_forward.1} parent=0 // pred_region
    _
  $region17: #{embeddings_forward.1} parent=0 // pred_fallthru
    _
  // Predicated region
  $region18: #{embeddings_forward.1} parent=0 // pred_check
    _
  $region19: #{embeddings_forward.1} parent=0 // pred_check_branch
    %1649 = sbr.rel (0) target = $region21
  $region20: #{embeddings_forward.1} parent=0 // pred_region
    _
  $region21: #{embeddings_forward.1} parent=0 // pred_fallthru
    _

</llo_original>
